<compile_context>
chip_gen: v7x
topology: tpu7x:2x2x1
jax: 0.10.0
libtpu: 0.0.40
codegen_flags: <defaults>
</compile_context>

<pallas_src>
import functools

import jax
import jax.numpy as jnp
from jax.experimental import pallas as pl
from jax.experimental.pallas import tpu as pltpu

# Layer sizes of the reference module: Linear(4,10) -> Linear(10,10) -> Linear(10,2)
IN, H1, H2, OUT = 4, 10, 10, 2
LANE = 128

# Offsets into the single packed parameter buffer (PyTorch (out, in) weight layout).
OFF_W1 = 0
OFF_B1 = OFF_W1 + H1 * IN          # 40
OFF_W2 = OFF_B1 + H1               # 50
OFF_B2 = OFF_W2 + H2 * H1          # 150
OFF_W3 = OFF_B2 + H2               # 160
OFF_B3 = OFF_W3 + OUT * H2         # 180
N_PARAMS = OFF_B3 + OUT            # 182


def mlp_kernel(p_ref, x_ref, o_ref):
    """x_ref: (IN, block_b) f32, o_ref: (OUT, block_b) f32, p_ref: (182,) f32 in SMEM."""
    # Hoist all 182 scalar reads (cheap SMEM sld's) out of the lane-chunk loop.
    w1 = [[p_ref[OFF_W1 + o * IN + k] for k in range(IN)] for o in range(H1)]
    b1 = [p_ref[OFF_B1 + o] for o in range(H1)]
    w2 = [[p_ref[OFF_W2 + o * H1 + k] for k in range(H1)] for o in range(H2)]
    b2 = [p_ref[OFF_B2 + o] for o in range(H2)]
    w3 = [[p_ref[OFF_W3 + o * H2 + k] for k in range(H2)] for o in range(OUT)]
    b3 = [p_ref[OFF_B3 + o] for o in range(OUT)]

    # Process the block in 128-lane chunks: every intermediate row is exactly one vreg,
    # so the live set (4 + 10 + 10 + 2 rows) stays far below the 64-vreg budget while the
    # grid block itself stays large (amortizes the ~0.35 us per-grid-step overhead).
    n_chunks = x_ref.shape[1] // LANE
    for c in range(n_chunks):
        sl = slice(c * LANE, (c + 1) * LANE)
        x = x_ref[:, sl]                                    # (IN, 128)
        xin = [x[k:k + 1, :] for k in range(IN)]            # IN x (1, 128)

        # fc1 + relu  (scalar x vector FMAs on the VPU)
        h1 = []
        for o in range(H1):
            acc = xin[0] * w1[o][0]
            for k in range(1, IN):
                acc = acc + xin[k] * w1[o][k]
            h1.append(jnp.maximum(acc + b1[o], 0.0))

        # fc2 + relu
        h2 = []
        for o in range(H2):
            acc = h1[0] * w2[o][0]
            for k in range(1, H1):
                acc = acc + h1[k] * w2[o][k]
            h2.append(jnp.maximum(acc + b2[o], 0.0))

        # fc3 (no activation)
        rows = []
        for o in range(OUT):
            acc = h2[0] * w3[o][0]
            for k in range(1, H2):
                acc = acc + h2[k] * w3[o][k]
            rows.append(acc + b3[o])

        o_ref[:, sl] = jnp.concatenate(rows, axis=0)        # (OUT, 128), unmasked lane-dense store


def pack_params(params):
    """Flatten all weights/biases into one 1-D f32 buffer (single SMEM input, one DMA)."""
    return jnp.concatenate([
        params["w1"].reshape(-1), params["b1"].reshape(-1),
        params["w2"].reshape(-1), params["b2"].reshape(-1),
        params["w3"].reshape(-1), params["b3"].reshape(-1),
    ]).astype(jnp.float32)


def _round_up(n, m):
    return ((n + m - 1) // m) * m


@functools.partial(jax.jit, static_argnames=("block_b",))
def neural_network_forward(x, packed_params, block_b=1024):
    """x: (B, 4) f32 -> (B, 2) f32; same math as the PyTorch module's forward."""
    B = x.shape[0]
    # Lane-dense feature-major layout: pad batch to a multiple of the block and transpose.
    bb = min(block_b, _round_up(B, LANE))
    Bp = _round_up(B, bb)
    x_t = jnp.pad(x.astype(jnp.float32), ((0, Bp - B), (0, 0))).T      # (IN, Bp)

    out_t = pl.pallas_call(
        mlp_kernel,
        out_shape=jax.ShapeDtypeStruct((OUT, Bp), jnp.float32),
        grid=(Bp // bb,),
        in_specs=[
            # One packed parameter buffer, fully resident in SMEM across all grid steps.
            pl.BlockSpec(memory_space=pltpu.MemorySpace.SMEM),
            # Batch-tiled, lane-dense activation block (VMEM footprint per step ~24 KiB
            # double-buffered -> safe even under v7x's 64 MiB VMEM).
            pl.BlockSpec((IN, bb), lambda i: (0, i)),
        ],
        out_specs=pl.BlockSpec((OUT, bb), lambda i: (0, i)),
        compiler_params=pltpu.CompilerParams(
            # Batch axis is embarrassingly parallel: lets v7x shard the grid across its
            # 2 TensorCores (no-op on v5e/v6e).
            dimension_semantics=("parallel",),
        ),
    )(packed_params, x_t)

    # Un-pad / un-transpose in the wrapper (cheap XLA ops).
    return out_t[:, :B].T


def init_params(key):
    """Deterministic init matching nn.Linear defaults: uniform(+/- 1/sqrt(fan_in))."""
    ks = jax.random.split(key, 6)
    s1 = 1.0 / (IN ** 0.5)
    s2 = 1.0 / (H1 ** 0.5)
    s3 = 1.0 / (H2 ** 0.5)
    return {
        "w1": jax.random.uniform(ks[0], (H1, IN), jnp.float32, -s1, s1),
        "b1": jax.random.uniform(ks[1], (H1,), jnp.float32, -s1, s1),
        "w2": jax.random.uniform(ks[2], (H2, H1), jnp.float32, -s2, s2),
        "b2": jax.random.uniform(ks[3], (H2,), jnp.float32, -s2, s2),
        "w3": jax.random.uniform(ks[4], (OUT, H2), jnp.float32, -s3, s3),
        "b3": jax.random.uniform(ks[5], (OUT,), jnp.float32, -s3, s3),
    }


def reference_forward(x, params):
    h1 = jnp.maximum(x @ params["w1"].T + params["b1"], 0.0)
    h2 = jnp.maximum(h1 @ params["w2"].T + params["b2"], 0.0)
    return h2 @ params["w3"].T + params["b3"]


if __name__ == "__main__":
    key = jax.random.PRNGKey(0)
    kx, kp, kx2 = jax.random.split(key, 3)

    params = init_params(kp)
    packed = pack_params(params)
    assert packed.shape == (N_PARAMS,)

    # Small batch (exercises padding up to a single 128-lane block).
    B = 8
    x = jax.random.normal(kx, (B, IN), dtype=jnp.float32)
    out = neural_network_forward(x, packed)
    jax.block_until_ready(out)
    ref = reference_forward(x, params)
    assert out.shape == (B, OUT)
    assert jnp.allclose(out, ref, atol=1e-5, rtol=1e-5), "mismatch vs reference (B=8)"

    # Larger, non-multiple-of-128 batch (exercises multi-chunk + padding path).
    B2 = 300
    x2 = jax.random.normal(kx2, (B2, IN), dtype=jnp.float32)
    out2 = neural_network_forward(x2, packed)
    jax.block_until_ready(out2)
    ref2 = reference_forward(x2, params)
    assert out2.shape == (B2, OUT)
    assert jnp.allclose(out2, ref2, atol=1e-5, rtol=1e-5), "mismatch vs reference (B=300)"

    print("KERNEL_OK")
</pallas_src>

<mosaic_0001>
module attributes {stable_mosaic.version = 11 : i64} {
  func.func @mlp_kernel(%arg0: i32, %arg1: memref<182xf32, #tpu.memory_space<smem>>, %arg2: memref<4x128xf32, #tpu.memory_space<vmem>>, %arg3: memref<2x128xf32, #tpu.memory_space<vmem>>) attributes {dimension_semantics = [#tpu.dimension_semantics<parallel>], iteration_bounds = array<i64: 1>, scalar_prefetch = 0 : i64, scratch_operands = 0 : i64, tpu.core_type = #tpu.core_type<tc>, window_params = [{transform_indices = @transform_0, window_bounds = array<i64: 182>}, {transform_indices = @transform_1, window_bounds = array<i64: 4, 128>}, {transform_indices = @transform_2, window_bounds = array<i64: 2, 128>}]} {
    %c0 = arith.constant 0 : index
    %0 = memref.load %arg1[%c0] : memref<182xf32, #tpu.memory_space<smem>>
    %c1 = arith.constant 1 : index
    %1 = memref.load %arg1[%c1] : memref<182xf32, #tpu.memory_space<smem>>
    %c2 = arith.constant 2 : index
    %2 = memref.load %arg1[%c2] : memref<182xf32, #tpu.memory_space<smem>>
    %c3 = arith.constant 3 : index
    %3 = memref.load %arg1[%c3] : memref<182xf32, #tpu.memory_space<smem>>
    %c4 = arith.constant 4 : index
    %4 = memref.load %arg1[%c4] : memref<182xf32, #tpu.memory_space<smem>>
    %c5 = arith.constant 5 : index
    %5 = memref.load %arg1[%c5] : memref<182xf32, #tpu.memory_space<smem>>
    %c6 = arith.constant 6 : index
    %6 = memref.load %arg1[%c6] : memref<182xf32, #tpu.memory_space<smem>>
    %c7 = arith.constant 7 : index
    %7 = memref.load %arg1[%c7] : memref<182xf32, #tpu.memory_space<smem>>
    %c8 = arith.constant 8 : index
    %8 = memref.load %arg1[%c8] : memref<182xf32, #tpu.memory_space<smem>>
    %c9 = arith.constant 9 : index
    %9 = memref.load %arg1[%c9] : memref<182xf32, #tpu.memory_space<smem>>
    %c10 = arith.constant 10 : index
    %10 = memref.load %arg1[%c10] : memref<182xf32, #tpu.memory_space<smem>>
    %c11 = arith.constant 11 : index
    %11 = memref.load %arg1[%c11] : memref<182xf32, #tpu.memory_space<smem>>
    %c12 = arith.constant 12 : index
    %12 = memref.load %arg1[%c12] : memref<182xf32, #tpu.memory_space<smem>>
    %c13 = arith.constant 13 : index
    %13 = memref.load %arg1[%c13] : memref<182xf32, #tpu.memory_space<smem>>
    %c14 = arith.constant 14 : index
    %14 = memref.load %arg1[%c14] : memref<182xf32, #tpu.memory_space<smem>>
    %c15 = arith.constant 15 : index
    %15 = memref.load %arg1[%c15] : memref<182xf32, #tpu.memory_space<smem>>
    %c16 = arith.constant 16 : index
    %16 = memref.load %arg1[%c16] : memref<182xf32, #tpu.memory_space<smem>>
    %c17 = arith.constant 17 : index
    %17 = memref.load %arg1[%c17] : memref<182xf32, #tpu.memory_space<smem>>
    %c18 = arith.constant 18 : index
    %18 = memref.load %arg1[%c18] : memref<182xf32, #tpu.memory_space<smem>>
    %c19 = arith.constant 19 : index
    %19 = memref.load %arg1[%c19] : memref<182xf32, #tpu.memory_space<smem>>
    %c20 = arith.constant 20 : index
    %20 = memref.load %arg1[%c20] : memref<182xf32, #tpu.memory_space<smem>>
    %c21 = arith.constant 21 : index
    %21 = memref.load %arg1[%c21] : memref<182xf32, #tpu.memory_space<smem>>
    %c22 = arith.constant 22 : index
    %22 = memref.load %arg1[%c22] : memref<182xf32, #tpu.memory_space<smem>>
    %c23 = arith.constant 23 : index
    %23 = memref.load %arg1[%c23] : memref<182xf32, #tpu.memory_space<smem>>
    %c24 = arith.constant 24 : index
    %24 = memref.load %arg1[%c24] : memref<182xf32, #tpu.memory_space<smem>>
    %c25 = arith.constant 25 : index
    %25 = memref.load %arg1[%c25] : memref<182xf32, #tpu.memory_space<smem>>
    %c26 = arith.constant 26 : index
    %26 = memref.load %arg1[%c26] : memref<182xf32, #tpu.memory_space<smem>>
    %c27 = arith.constant 27 : index
    %27 = memref.load %arg1[%c27] : memref<182xf32, #tpu.memory_space<smem>>
    %c28 = arith.constant 28 : index
    %28 = memref.load %arg1[%c28] : memref<182xf32, #tpu.memory_space<smem>>
    %c29 = arith.constant 29 : index
    %29 = memref.load %arg1[%c29] : memref<182xf32, #tpu.memory_space<smem>>
    %c30 = arith.constant 30 : index
    %30 = memref.load %arg1[%c30] : memref<182xf32, #tpu.memory_space<smem>>
    %c31 = arith.constant 31 : index
    %31 = memref.load %arg1[%c31] : memref<182xf32, #tpu.memory_space<smem>>
    %c32 = arith.constant 32 : index
    %32 = memref.load %arg1[%c32] : memref<182xf32, #tpu.memory_space<smem>>
    %c33 = arith.constant 33 : index
    %33 = memref.load %arg1[%c33] : memref<182xf32, #tpu.memory_space<smem>>
    %c34 = arith.constant 34 : index
    %34 = memref.load %arg1[%c34] : memref<182xf32, #tpu.memory_space<smem>>
    %c35 = arith.constant 35 : index
    %35 = memref.load %arg1[%c35] : memref<182xf32, #tpu.memory_space<smem>>
    %c36 = arith.constant 36 : index
    %36 = memref.load %arg1[%c36] : memref<182xf32, #tpu.memory_space<smem>>
    %c37 = arith.constant 37 : index
    %37 = memref.load %arg1[%c37] : memref<182xf32, #tpu.memory_space<smem>>
    %c38 = arith.constant 38 : index
    %38 = memref.load %arg1[%c38] : memref<182xf32, #tpu.memory_space<smem>>
    %c39 = arith.constant 39 : index
    %39 = memref.load %arg1[%c39] : memref<182xf32, #tpu.memory_space<smem>>
    %c40 = arith.constant 40 : index
    %40 = memref.load %arg1[%c40] : memref<182xf32, #tpu.memory_space<smem>>
    %c41 = arith.constant 41 : index
    %41 = memref.load %arg1[%c41] : memref<182xf32, #tpu.memory_space<smem>>
    %c42 = arith.constant 42 : index
    %42 = memref.load %arg1[%c42] : memref<182xf32, #tpu.memory_space<smem>>
    %c43 = arith.constant 43 : index
    %43 = memref.load %arg1[%c43] : memref<182xf32, #tpu.memory_space<smem>>
    %c44 = arith.constant 44 : index
    %44 = memref.load %arg1[%c44] : memref<182xf32, #tpu.memory_space<smem>>
    %c45 = arith.constant 45 : index
    %45 = memref.load %arg1[%c45] : memref<182xf32, #tpu.memory_space<smem>>
    %c46 = arith.constant 46 : index
    %46 = memref.load %arg1[%c46] : memref<182xf32, #tpu.memory_space<smem>>
    %c47 = arith.constant 47 : index
    %47 = memref.load %arg1[%c47] : memref<182xf32, #tpu.memory_space<smem>>
    %c48 = arith.constant 48 : index
    %48 = memref.load %arg1[%c48] : memref<182xf32, #tpu.memory_space<smem>>
    %c49 = arith.constant 49 : index
    %49 = memref.load %arg1[%c49] : memref<182xf32, #tpu.memory_space<smem>>
    %c50 = arith.constant 50 : index
    %50 = memref.load %arg1[%c50] : memref<182xf32, #tpu.memory_space<smem>>
    %c51 = arith.constant 51 : index
    %51 = memref.load %arg1[%c51] : memref<182xf32, #tpu.memory_space<smem>>
    %c52 = arith.constant 52 : index
    %52 = memref.load %arg1[%c52] : memref<182xf32, #tpu.memory_space<smem>>
    %c53 = arith.constant 53 : index
    %53 = memref.load %arg1[%c53] : memref<182xf32, #tpu.memory_space<smem>>
    %c54 = arith.constant 54 : index
    %54 = memref.load %arg1[%c54] : memref<182xf32, #tpu.memory_space<smem>>
    %c55 = arith.constant 55 : index
    %55 = memref.load %arg1[%c55] : memref<182xf32, #tpu.memory_space<smem>>
    %c56 = arith.constant 56 : index
    %56 = memref.load %arg1[%c56] : memref<182xf32, #tpu.memory_space<smem>>
    %c57 = arith.constant 57 : index
    %57 = memref.load %arg1[%c57] : memref<182xf32, #tpu.memory_space<smem>>
    %c58 = arith.constant 58 : index
    %58 = memref.load %arg1[%c58] : memref<182xf32, #tpu.memory_space<smem>>
    %c59 = arith.constant 59 : index
    %59 = memref.load %arg1[%c59] : memref<182xf32, #tpu.memory_space<smem>>
    %c60 = arith.constant 60 : index
    %60 = memref.load %arg1[%c60] : memref<182xf32, #tpu.memory_space<smem>>
    %c61 = arith.constant 61 : index
    %61 = memref.load %arg1[%c61] : memref<182xf32, #tpu.memory_space<smem>>
    %c62 = arith.constant 62 : index
    %62 = memref.load %arg1[%c62] : memref<182xf32, #tpu.memory_space<smem>>
    %c63 = arith.constant 63 : index
    %63 = memref.load %arg1[%c63] : memref<182xf32, #tpu.memory_space<smem>>
    %c64 = arith.constant 64 : index
    %64 = memref.load %arg1[%c64] : memref<182xf32, #tpu.memory_space<smem>>
    %c65 = arith.constant 65 : index
    %65 = memref.load %arg1[%c65] : memref<182xf32, #tpu.memory_space<smem>>
    %c66 = arith.constant 66 : index
    %66 = memref.load %arg1[%c66] : memref<182xf32, #tpu.memory_space<smem>>
    %c67 = arith.constant 67 : index
    %67 = memref.load %arg1[%c67] : memref<182xf32, #tpu.memory_space<smem>>
    %c68 = arith.constant 68 : index
    %68 = memref.load %arg1[%c68] : memref<182xf32, #tpu.memory_space<smem>>
    %c69 = arith.constant 69 : index
    %69 = memref.load %arg1[%c69] : memref<182xf32, #tpu.memory_space<smem>>
    %c70 = arith.constant 70 : index
    %70 = memref.load %arg1[%c70] : memref<182xf32, #tpu.memory_space<smem>>
    %c71 = arith.constant 71 : index
    %71 = memref.load %arg1[%c71] : memref<182xf32, #tpu.memory_space<smem>>
    %c72 = arith.constant 72 : index
    %72 = memref.load %arg1[%c72] : memref<182xf32, #tpu.memory_space<smem>>
    %c73 = arith.constant 73 : index
    %73 = memref.load %arg1[%c73] : memref<182xf32, #tpu.memory_space<smem>>
    %c74 = arith.constant 74 : index
    %74 = memref.load %arg1[%c74] : memref<182xf32, #tpu.memory_space<smem>>
    %c75 = arith.constant 75 : index
    %75 = memref.load %arg1[%c75] : memref<182xf32, #tpu.memory_space<smem>>
    %c76 = arith.constant 76 : index
    %76 = memref.load %arg1[%c76] : memref<182xf32, #tpu.memory_space<smem>>
    %c77 = arith.constant 77 : index
    %77 = memref.load %arg1[%c77] : memref<182xf32, #tpu.memory_space<smem>>
    %c78 = arith.constant 78 : index
    %78 = memref.load %arg1[%c78] : memref<182xf32, #tpu.memory_space<smem>>
    %c79 = arith.constant 79 : index
    %79 = memref.load %arg1[%c79] : memref<182xf32, #tpu.memory_space<smem>>
    %c80 = arith.constant 80 : index
    %80 = memref.load %arg1[%c80] : memref<182xf32, #tpu.memory_space<smem>>
    %c81 = arith.constant 81 : index
    %81 = memref.load %arg1[%c81] : memref<182xf32, #tpu.memory_space<smem>>
    %c82 = arith.constant 82 : index
    %82 = memref.load %arg1[%c82] : memref<182xf32, #tpu.memory_space<smem>>
    %c83 = arith.constant 83 : index
    %83 = memref.load %arg1[%c83] : memref<182xf32, #tpu.memory_space<smem>>
    %c84 = arith.constant 84 : index
    %84 = memref.load %arg1[%c84] : memref<182xf32, #tpu.memory_space<smem>>
    %c85 = arith.constant 85 : index
    %85 = memref.load %arg1[%c85] : memref<182xf32, #tpu.memory_space<smem>>
    %c86 = arith.constant 86 : index
    %86 = memref.load %arg1[%c86] : memref<182xf32, #tpu.memory_space<smem>>
    %c87 = arith.constant 87 : index
    %87 = memref.load %arg1[%c87] : memref<182xf32, #tpu.memory_space<smem>>
    %c88 = arith.constant 88 : index
    %88 = memref.load %arg1[%c88] : memref<182xf32, #tpu.memory_space<smem>>
    %c89 = arith.constant 89 : index
    %89 = memref.load %arg1[%c89] : memref<182xf32, #tpu.memory_space<smem>>
    %c90 = arith.constant 90 : index
    %90 = memref.load %arg1[%c90] : memref<182xf32, #tpu.memory_space<smem>>
    %c91 = arith.constant 91 : index
    %91 = memref.load %arg1[%c91] : memref<182xf32, #tpu.memory_space<smem>>
    %c92 = arith.constant 92 : index
    %92 = memref.load %arg1[%c92] : memref<182xf32, #tpu.memory_space<smem>>
    %c93 = arith.constant 93 : index
    %93 = memref.load %arg1[%c93] : memref<182xf32, #tpu.memory_space<smem>>
    %c94 = arith.constant 94 : index
    %94 = memref.load %arg1[%c94] : memref<182xf32, #tpu.memory_space<smem>>
    %c95 = arith.constant 95 : index
    %95 = memref.load %arg1[%c95] : memref<182xf32, #tpu.memory_space<smem>>
    %c96 = arith.constant 96 : index
    %96 = memref.load %arg1[%c96] : memref<182xf32, #tpu.memory_space<smem>>
    %c97 = arith.constant 97 : index
    %97 = memref.load %arg1[%c97] : memref<182xf32, #tpu.memory_space<smem>>
    %c98 = arith.constant 98 : index
    %98 = memref.load %arg1[%c98] : memref<182xf32, #tpu.memory_space<smem>>
    %c99 = arith.constant 99 : index
    %99 = memref.load %arg1[%c99] : memref<182xf32, #tpu.memory_space<smem>>
    %c100 = arith.constant 100 : index
    %100 = memref.load %arg1[%c100] : memref<182xf32, #tpu.memory_space<smem>>
    %c101 = arith.constant 101 : index
    %101 = memref.load %arg1[%c101] : memref<182xf32, #tpu.memory_space<smem>>
    %c102 = arith.constant 102 : index
    %102 = memref.load %arg1[%c102] : memref<182xf32, #tpu.memory_space<smem>>
    %c103 = arith.constant 103 : index
    %103 = memref.load %arg1[%c103] : memref<182xf32, #tpu.memory_space<smem>>
    %c104 = arith.constant 104 : index
    %104 = memref.load %arg1[%c104] : memref<182xf32, #tpu.memory_space<smem>>
    %c105 = arith.constant 105 : index
    %105 = memref.load %arg1[%c105] : memref<182xf32, #tpu.memory_space<smem>>
    %c106 = arith.constant 106 : index
    %106 = memref.load %arg1[%c106] : memref<182xf32, #tpu.memory_space<smem>>
    %c107 = arith.constant 107 : index
    %107 = memref.load %arg1[%c107] : memref<182xf32, #tpu.memory_space<smem>>
    %c108 = arith.constant 108 : index
    %108 = memref.load %arg1[%c108] : memref<182xf32, #tpu.memory_space<smem>>
    %c109 = arith.constant 109 : index
    %109 = memref.load %arg1[%c109] : memref<182xf32, #tpu.memory_space<smem>>
    %c110 = arith.constant 110 : index
    %110 = memref.load %arg1[%c110] : memref<182xf32, #tpu.memory_space<smem>>
    %c111 = arith.constant 111 : index
    %111 = memref.load %arg1[%c111] : memref<182xf32, #tpu.memory_space<smem>>
    %c112 = arith.constant 112 : index
    %112 = memref.load %arg1[%c112] : memref<182xf32, #tpu.memory_space<smem>>
    %c113 = arith.constant 113 : index
    %113 = memref.load %arg1[%c113] : memref<182xf32, #tpu.memory_space<smem>>
    %c114 = arith.constant 114 : index
    %114 = memref.load %arg1[%c114] : memref<182xf32, #tpu.memory_space<smem>>
    %c115 = arith.constant 115 : index
    %115 = memref.load %arg1[%c115] : memref<182xf32, #tpu.memory_space<smem>>
    %c116 = arith.constant 116 : index
    %116 = memref.load %arg1[%c116] : memref<182xf32, #tpu.memory_space<smem>>
    %c117 = arith.constant 117 : index
    %117 = memref.load %arg1[%c117] : memref<182xf32, #tpu.memory_space<smem>>
    %c118 = arith.constant 118 : index
    %118 = memref.load %arg1[%c118] : memref<182xf32, #tpu.memory_space<smem>>
    %c119 = arith.constant 119 : index
    %119 = memref.load %arg1[%c119] : memref<182xf32, #tpu.memory_space<smem>>
    %c120 = arith.constant 120 : index
    %120 = memref.load %arg1[%c120] : memref<182xf32, #tpu.memory_space<smem>>
    %c121 = arith.constant 121 : index
    %121 = memref.load %arg1[%c121] : memref<182xf32, #tpu.memory_space<smem>>
    %c122 = arith.constant 122 : index
    %122 = memref.load %arg1[%c122] : memref<182xf32, #tpu.memory_space<smem>>
    %c123 = arith.constant 123 : index
    %123 = memref.load %arg1[%c123] : memref<182xf32, #tpu.memory_space<smem>>
    %c124 = arith.constant 124 : index
    %124 = memref.load %arg1[%c124] : memref<182xf32, #tpu.memory_space<smem>>
    %c125 = arith.constant 125 : index
    %125 = memref.load %arg1[%c125] : memref<182xf32, #tpu.memory_space<smem>>
    %c126 = arith.constant 126 : index
    %126 = memref.load %arg1[%c126] : memref<182xf32, #tpu.memory_space<smem>>
    %c127 = arith.constant 127 : index
    %127 = memref.load %arg1[%c127] : memref<182xf32, #tpu.memory_space<smem>>
    %c128 = arith.constant 128 : index
    %128 = memref.load %arg1[%c128] : memref<182xf32, #tpu.memory_space<smem>>
    %c129 = arith.constant 129 : index
    %129 = memref.load %arg1[%c129] : memref<182xf32, #tpu.memory_space<smem>>
    %c130 = arith.constant 130 : index
    %130 = memref.load %arg1[%c130] : memref<182xf32, #tpu.memory_space<smem>>
    %c131 = arith.constant 131 : index
    %131 = memref.load %arg1[%c131] : memref<182xf32, #tpu.memory_space<smem>>
    %c132 = arith.constant 132 : index
    %132 = memref.load %arg1[%c132] : memref<182xf32, #tpu.memory_space<smem>>
    %c133 = arith.constant 133 : index
    %133 = memref.load %arg1[%c133] : memref<182xf32, #tpu.memory_space<smem>>
    %c134 = arith.constant 134 : index
    %134 = memref.load %arg1[%c134] : memref<182xf32, #tpu.memory_space<smem>>
    %c135 = arith.constant 135 : index
    %135 = memref.load %arg1[%c135] : memref<182xf32, #tpu.memory_space<smem>>
    %c136 = arith.constant 136 : index
    %136 = memref.load %arg1[%c136] : memref<182xf32, #tpu.memory_space<smem>>
    %c137 = arith.constant 137 : index
    %137 = memref.load %arg1[%c137] : memref<182xf32, #tpu.memory_space<smem>>
    %c138 = arith.constant 138 : index
    %138 = memref.load %arg1[%c138] : memref<182xf32, #tpu.memory_space<smem>>
    %c139 = arith.constant 139 : index
    %139 = memref.load %arg1[%c139] : memref<182xf32, #tpu.memory_space<smem>>
    %c140 = arith.constant 140 : index
    %140 = memref.load %arg1[%c140] : memref<182xf32, #tpu.memory_space<smem>>
    %c141 = arith.constant 141 : index
    %141 = memref.load %arg1[%c141] : memref<182xf32, #tpu.memory_space<smem>>
    %c142 = arith.constant 142 : index
    %142 = memref.load %arg1[%c142] : memref<182xf32, #tpu.memory_space<smem>>
    %c143 = arith.constant 143 : index
    %143 = memref.load %arg1[%c143] : memref<182xf32, #tpu.memory_space<smem>>
    %c144 = arith.constant 144 : index
    %144 = memref.load %arg1[%c144] : memref<182xf32, #tpu.memory_space<smem>>
    %c145 = arith.constant 145 : index
    %145 = memref.load %arg1[%c145] : memref<182xf32, #tpu.memory_space<smem>>
    %c146 = arith.constant 146 : index
    %146 = memref.load %arg1[%c146] : memref<182xf32, #tpu.memory_space<smem>>
    %c147 = arith.constant 147 : index
    %147 = memref.load %arg1[%c147] : memref<182xf32, #tpu.memory_space<smem>>
    %c148 = arith.constant 148 : index
    %148 = memref.load %arg1[%c148] : memref<182xf32, #tpu.memory_space<smem>>
    %c149 = arith.constant 149 : index
    %149 = memref.load %arg1[%c149] : memref<182xf32, #tpu.memory_space<smem>>
    %c150 = arith.constant 150 : index
    %150 = memref.load %arg1[%c150] : memref<182xf32, #tpu.memory_space<smem>>
    %c151 = arith.constant 151 : index
    %151 = memref.load %arg1[%c151] : memref<182xf32, #tpu.memory_space<smem>>
    %c152 = arith.constant 152 : index
    %152 = memref.load %arg1[%c152] : memref<182xf32, #tpu.memory_space<smem>>
    %c153 = arith.constant 153 : index
    %153 = memref.load %arg1[%c153] : memref<182xf32, #tpu.memory_space<smem>>
    %c154 = arith.constant 154 : index
    %154 = memref.load %arg1[%c154] : memref<182xf32, #tpu.memory_space<smem>>
    %c155 = arith.constant 155 : index
    %155 = memref.load %arg1[%c155] : memref<182xf32, #tpu.memory_space<smem>>
    %c156 = arith.constant 156 : index
    %156 = memref.load %arg1[%c156] : memref<182xf32, #tpu.memory_space<smem>>
    %c157 = arith.constant 157 : index
    %157 = memref.load %arg1[%c157] : memref<182xf32, #tpu.memory_space<smem>>
    %c158 = arith.constant 158 : index
    %158 = memref.load %arg1[%c158] : memref<182xf32, #tpu.memory_space<smem>>
    %c159 = arith.constant 159 : index
    %159 = memref.load %arg1[%c159] : memref<182xf32, #tpu.memory_space<smem>>
    %c160 = arith.constant 160 : index
    %160 = memref.load %arg1[%c160] : memref<182xf32, #tpu.memory_space<smem>>
    %c161 = arith.constant 161 : index
    %161 = memref.load %arg1[%c161] : memref<182xf32, #tpu.memory_space<smem>>
    %c162 = arith.constant 162 : index
    %162 = memref.load %arg1[%c162] : memref<182xf32, #tpu.memory_space<smem>>
    %c163 = arith.constant 163 : index
    %163 = memref.load %arg1[%c163] : memref<182xf32, #tpu.memory_space<smem>>
    %c164 = arith.constant 164 : index
    %164 = memref.load %arg1[%c164] : memref<182xf32, #tpu.memory_space<smem>>
    %c165 = arith.constant 165 : index
    %165 = memref.load %arg1[%c165] : memref<182xf32, #tpu.memory_space<smem>>
    %c166 = arith.constant 166 : index
    %166 = memref.load %arg1[%c166] : memref<182xf32, #tpu.memory_space<smem>>
    %c167 = arith.constant 167 : index
    %167 = memref.load %arg1[%c167] : memref<182xf32, #tpu.memory_space<smem>>
    %c168 = arith.constant 168 : index
    %168 = memref.load %arg1[%c168] : memref<182xf32, #tpu.memory_space<smem>>
    %c169 = arith.constant 169 : index
    %169 = memref.load %arg1[%c169] : memref<182xf32, #tpu.memory_space<smem>>
    %c170 = arith.constant 170 : index
    %170 = memref.load %arg1[%c170] : memref<182xf32, #tpu.memory_space<smem>>
    %c171 = arith.constant 171 : index
    %171 = memref.load %arg1[%c171] : memref<182xf32, #tpu.memory_space<smem>>
    %c172 = arith.constant 172 : index
    %172 = memref.load %arg1[%c172] : memref<182xf32, #tpu.memory_space<smem>>
    %c173 = arith.constant 173 : index
    %173 = memref.load %arg1[%c173] : memref<182xf32, #tpu.memory_space<smem>>
    %c174 = arith.constant 174 : index
    %174 = memref.load %arg1[%c174] : memref<182xf32, #tpu.memory_space<smem>>
    %c175 = arith.constant 175 : index
    %175 = memref.load %arg1[%c175] : memref<182xf32, #tpu.memory_space<smem>>
    %c176 = arith.constant 176 : index
    %176 = memref.load %arg1[%c176] : memref<182xf32, #tpu.memory_space<smem>>
    %c177 = arith.constant 177 : index
    %177 = memref.load %arg1[%c177] : memref<182xf32, #tpu.memory_space<smem>>
    %c178 = arith.constant 178 : index
    %178 = memref.load %arg1[%c178] : memref<182xf32, #tpu.memory_space<smem>>
    %c179 = arith.constant 179 : index
    %179 = memref.load %arg1[%c179] : memref<182xf32, #tpu.memory_space<smem>>
    %c180 = arith.constant 180 : index
    %180 = memref.load %arg1[%c180] : memref<182xf32, #tpu.memory_space<smem>>
    %c181 = arith.constant 181 : index
    %181 = memref.load %arg1[%c181] : memref<182xf32, #tpu.memory_space<smem>>
    %c0_0 = arith.constant 0 : index
    %c0_1 = arith.constant 0 : index
    %182 = vector.load %arg2[%c0_0, %c0_1] : memref<4x128xf32, #tpu.memory_space<vmem>>, vector<4x128xf32>
    %183 = vector.extract_strided_slice %182 {offsets = [0, 0], sizes = [1, 128], strides = [1, 1]} : vector<4x128xf32> to vector<1x128xf32>
    %184 = vector.extract_strided_slice %182 {offsets = [1, 0], sizes = [1, 128], strides = [1, 1]} : vector<4x128xf32> to vector<1x128xf32>
    %185 = vector.extract_strided_slice %182 {offsets = [2, 0], sizes = [1, 128], strides = [1, 1]} : vector<4x128xf32> to vector<1x128xf32>
    %186 = vector.extract_strided_slice %182 {offsets = [3, 0], sizes = [1, 128], strides = [1, 1]} : vector<4x128xf32> to vector<1x128xf32>
    %187 = vector.broadcast %0 : f32 to vector<1x128xf32>
    %188 = arith.mulf %183, %187 : vector<1x128xf32>
    %189 = vector.broadcast %1 : f32 to vector<1x128xf32>
    %190 = arith.mulf %184, %189 : vector<1x128xf32>
    %191 = arith.addf %188, %190 : vector<1x128xf32>
    %192 = vector.broadcast %2 : f32 to vector<1x128xf32>
    %193 = arith.mulf %185, %192 : vector<1x128xf32>
    %194 = arith.addf %191, %193 : vector<1x128xf32>
    %195 = vector.broadcast %3 : f32 to vector<1x128xf32>
    %196 = arith.mulf %186, %195 : vector<1x128xf32>
    %197 = arith.addf %194, %196 : vector<1x128xf32>
    %198 = vector.broadcast %40 : f32 to vector<1x128xf32>
    %199 = arith.addf %197, %198 : vector<1x128xf32>
    %cst = arith.constant 0.000000e+00 : f32
    %200 = vector.broadcast %cst : f32 to vector<1x128xf32>
    %201 = arith.maximumf %199, %200 : vector<1x128xf32>
    %202 = vector.broadcast %4 : f32 to vector<1x128xf32>
    %203 = arith.mulf %183, %202 : vector<1x128xf32>
    %204 = vector.broadcast %5 : f32 to vector<1x128xf32>
    %205 = arith.mulf %184, %204 : vector<1x128xf32>
    %206 = arith.addf %203, %205 : vector<1x128xf32>
    %207 = vector.broadcast %6 : f32 to vector<1x128xf32>
    %208 = arith.mulf %185, %207 : vector<1x128xf32>
    %209 = arith.addf %206, %208 : vector<1x128xf32>
    %210 = vector.broadcast %7 : f32 to vector<1x128xf32>
    %211 = arith.mulf %186, %210 : vector<1x128xf32>
    %212 = arith.addf %209, %211 : vector<1x128xf32>
    %213 = vector.broadcast %41 : f32 to vector<1x128xf32>
    %214 = arith.addf %212, %213 : vector<1x128xf32>
    %cst_2 = arith.constant 0.000000e+00 : f32
    %215 = vector.broadcast %cst_2 : f32 to vector<1x128xf32>
    %216 = arith.maximumf %214, %215 : vector<1x128xf32>
    %217 = vector.broadcast %8 : f32 to vector<1x128xf32>
    %218 = arith.mulf %183, %217 : vector<1x128xf32>
    %219 = vector.broadcast %9 : f32 to vector<1x128xf32>
    %220 = arith.mulf %184, %219 : vector<1x128xf32>
    %221 = arith.addf %218, %220 : vector<1x128xf32>
    %222 = vector.broadcast %10 : f32 to vector<1x128xf32>
    %223 = arith.mulf %185, %222 : vector<1x128xf32>
    %224 = arith.addf %221, %223 : vector<1x128xf32>
    %225 = vector.broadcast %11 : f32 to vector<1x128xf32>
    %226 = arith.mulf %186, %225 : vector<1x128xf32>
    %227 = arith.addf %224, %226 : vector<1x128xf32>
    %228 = vector.broadcast %42 : f32 to vector<1x128xf32>
    %229 = arith.addf %227, %228 : vector<1x128xf32>
    %cst_3 = arith.constant 0.000000e+00 : f32
    %230 = vector.broadcast %cst_3 : f32 to vector<1x128xf32>
    %231 = arith.maximumf %229, %230 : vector<1x128xf32>
    %232 = vector.broadcast %12 : f32 to vector<1x128xf32>
    %233 = arith.mulf %183, %232 : vector<1x128xf32>
    %234 = vector.broadcast %13 : f32 to vector<1x128xf32>
    %235 = arith.mulf %184, %234 : vector<1x128xf32>
    %236 = arith.addf %233, %235 : vector<1x128xf32>
    %237 = vector.broadcast %14 : f32 to vector<1x128xf32>
    %238 = arith.mulf %185, %237 : vector<1x128xf32>
    %239 = arith.addf %236, %238 : vector<1x128xf32>
    %240 = vector.broadcast %15 : f32 to vector<1x128xf32>
    %241 = arith.mulf %186, %240 : vector<1x128xf32>
    %242 = arith.addf %239, %241 : vector<1x128xf32>
    %243 = vector.broadcast %43 : f32 to vector<1x128xf32>
    %244 = arith.addf %242, %243 : vector<1x128xf32>
    %cst_4 = arith.constant 0.000000e+00 : f32
    %245 = vector.broadcast %cst_4 : f32 to vector<1x128xf32>
    %246 = arith.maximumf %244, %245 : vector<1x128xf32>
    %247 = vector.broadcast %16 : f32 to vector<1x128xf32>
    %248 = arith.mulf %183, %247 : vector<1x128xf32>
    %249 = vector.broadcast %17 : f32 to vector<1x128xf32>
    %250 = arith.mulf %184, %249 : vector<1x128xf32>
    %251 = arith.addf %248, %250 : vector<1x128xf32>
    %252 = vector.broadcast %18 : f32 to vector<1x128xf32>
    %253 = arith.mulf %185, %252 : vector<1x128xf32>
    %254 = arith.addf %251, %253 : vector<1x128xf32>
    %255 = vector.broadcast %19 : f32 to vector<1x128xf32>
    %256 = arith.mulf %186, %255 : vector<1x128xf32>
    %257 = arith.addf %254, %256 : vector<1x128xf32>
    %258 = vector.broadcast %44 : f32 to vector<1x128xf32>
    %259 = arith.addf %257, %258 : vector<1x128xf32>
    %cst_5 = arith.constant 0.000000e+00 : f32
    %260 = vector.broadcast %cst_5 : f32 to vector<1x128xf32>
    %261 = arith.maximumf %259, %260 : vector<1x128xf32>
    %262 = vector.broadcast %20 : f32 to vector<1x128xf32>
    %263 = arith.mulf %183, %262 : vector<1x128xf32>
    %264 = vector.broadcast %21 : f32 to vector<1x128xf32>
    %265 = arith.mulf %184, %264 : vector<1x128xf32>
    %266 = arith.addf %263, %265 : vector<1x128xf32>
    %267 = vector.broadcast %22 : f32 to vector<1x128xf32>
    %268 = arith.mulf %185, %267 : vector<1x128xf32>
    %269 = arith.addf %266, %268 : vector<1x128xf32>
    %270 = vector.broadcast %23 : f32 to vector<1x128xf32>
    %271 = arith.mulf %186, %270 : vector<1x128xf32>
    %272 = arith.addf %269, %271 : vector<1x128xf32>
    %273 = vector.broadcast %45 : f32 to vector<1x128xf32>
    %274 = arith.addf %272, %273 : vector<1x128xf32>
    %cst_6 = arith.constant 0.000000e+00 : f32
    %275 = vector.broadcast %cst_6 : f32 to vector<1x128xf32>
    %276 = arith.maximumf %274, %275 : vector<1x128xf32>
    %277 = vector.broadcast %24 : f32 to vector<1x128xf32>
    %278 = arith.mulf %183, %277 : vector<1x128xf32>
    %279 = vector.broadcast %25 : f32 to vector<1x128xf32>
    %280 = arith.mulf %184, %279 : vector<1x128xf32>
    %281 = arith.addf %278, %280 : vector<1x128xf32>
    %282 = vector.broadcast %26 : f32 to vector<1x128xf32>
    %283 = arith.mulf %185, %282 : vector<1x128xf32>
    %284 = arith.addf %281, %283 : vector<1x128xf32>
    %285 = vector.broadcast %27 : f32 to vector<1x128xf32>
    %286 = arith.mulf %186, %285 : vector<1x128xf32>
    %287 = arith.addf %284, %286 : vector<1x128xf32>
    %288 = vector.broadcast %46 : f32 to vector<1x128xf32>
    %289 = arith.addf %287, %288 : vector<1x128xf32>
    %cst_7 = arith.constant 0.000000e+00 : f32
    %290 = vector.broadcast %cst_7 : f32 to vector<1x128xf32>
    %291 = arith.maximumf %289, %290 : vector<1x128xf32>
    %292 = vector.broadcast %28 : f32 to vector<1x128xf32>
    %293 = arith.mulf %183, %292 : vector<1x128xf32>
    %294 = vector.broadcast %29 : f32 to vector<1x128xf32>
    %295 = arith.mulf %184, %294 : vector<1x128xf32>
    %296 = arith.addf %293, %295 : vector<1x128xf32>
    %297 = vector.broadcast %30 : f32 to vector<1x128xf32>
    %298 = arith.mulf %185, %297 : vector<1x128xf32>
    %299 = arith.addf %296, %298 : vector<1x128xf32>
    %300 = vector.broadcast %31 : f32 to vector<1x128xf32>
    %301 = arith.mulf %186, %300 : vector<1x128xf32>
    %302 = arith.addf %299, %301 : vector<1x128xf32>
    %303 = vector.broadcast %47 : f32 to vector<1x128xf32>
    %304 = arith.addf %302, %303 : vector<1x128xf32>
    %cst_8 = arith.constant 0.000000e+00 : f32
    %305 = vector.broadcast %cst_8 : f32 to vector<1x128xf32>
    %306 = arith.maximumf %304, %305 : vector<1x128xf32>
    %307 = vector.broadcast %32 : f32 to vector<1x128xf32>
    %308 = arith.mulf %183, %307 : vector<1x128xf32>
    %309 = vector.broadcast %33 : f32 to vector<1x128xf32>
    %310 = arith.mulf %184, %309 : vector<1x128xf32>
    %311 = arith.addf %308, %310 : vector<1x128xf32>
    %312 = vector.broadcast %34 : f32 to vector<1x128xf32>
    %313 = arith.mulf %185, %312 : vector<1x128xf32>
    %314 = arith.addf %311, %313 : vector<1x128xf32>
    %315 = vector.broadcast %35 : f32 to vector<1x128xf32>
    %316 = arith.mulf %186, %315 : vector<1x128xf32>
    %317 = arith.addf %314, %316 : vector<1x128xf32>
    %318 = vector.broadcast %48 : f32 to vector<1x128xf32>
    %319 = arith.addf %317, %318 : vector<1x128xf32>
    %cst_9 = arith.constant 0.000000e+00 : f32
    %320 = vector.broadcast %cst_9 : f32 to vector<1x128xf32>
    %321 = arith.maximumf %319, %320 : vector<1x128xf32>
    %322 = vector.broadcast %36 : f32 to vector<1x128xf32>
    %323 = arith.mulf %183, %322 : vector<1x128xf32>
    %324 = vector.broadcast %37 : f32 to vector<1x128xf32>
    %325 = arith.mulf %184, %324 : vector<1x128xf32>
    %326 = arith.addf %323, %325 : vector<1x128xf32>
    %327 = vector.broadcast %38 : f32 to vector<1x128xf32>
    %328 = arith.mulf %185, %327 : vector<1x128xf32>
    %329 = arith.addf %326, %328 : vector<1x128xf32>
    %330 = vector.broadcast %39 : f32 to vector<1x128xf32>
    %331 = arith.mulf %186, %330 : vector<1x128xf32>
    %332 = arith.addf %329, %331 : vector<1x128xf32>
    %333 = vector.broadcast %49 : f32 to vector<1x128xf32>
    %334 = arith.addf %332, %333 : vector<1x128xf32>
    %cst_10 = arith.constant 0.000000e+00 : f32
    %335 = vector.broadcast %cst_10 : f32 to vector<1x128xf32>
    %336 = arith.maximumf %334, %335 : vector<1x128xf32>
    %337 = vector.broadcast %50 : f32 to vector<1x128xf32>
    %338 = arith.mulf %201, %337 : vector<1x128xf32>
    %339 = vector.broadcast %51 : f32 to vector<1x128xf32>
    %340 = arith.mulf %216, %339 : vector<1x128xf32>
    %341 = arith.addf %338, %340 : vector<1x128xf32>
    %342 = vector.broadcast %52 : f32 to vector<1x128xf32>
    %343 = arith.mulf %231, %342 : vector<1x128xf32>
    %344 = arith.addf %341, %343 : vector<1x128xf32>
    %345 = vector.broadcast %53 : f32 to vector<1x128xf32>
    %346 = arith.mulf %246, %345 : vector<1x128xf32>
    %347 = arith.addf %344, %346 : vector<1x128xf32>
    %348 = vector.broadcast %54 : f32 to vector<1x128xf32>
    %349 = arith.mulf %261, %348 : vector<1x128xf32>
    %350 = arith.addf %347, %349 : vector<1x128xf32>
    %351 = vector.broadcast %55 : f32 to vector<1x128xf32>
    %352 = arith.mulf %276, %351 : vector<1x128xf32>
    %353 = arith.addf %350, %352 : vector<1x128xf32>
    %354 = vector.broadcast %56 : f32 to vector<1x128xf32>
    %355 = arith.mulf %291, %354 : vector<1x128xf32>
    %356 = arith.addf %353, %355 : vector<1x128xf32>
    %357 = vector.broadcast %57 : f32 to vector<1x128xf32>
    %358 = arith.mulf %306, %357 : vector<1x128xf32>
    %359 = arith.addf %356, %358 : vector<1x128xf32>
    %360 = vector.broadcast %58 : f32 to vector<1x128xf32>
    %361 = arith.mulf %321, %360 : vector<1x128xf32>
    %362 = arith.addf %359, %361 : vector<1x128xf32>
    %363 = vector.broadcast %59 : f32 to vector<1x128xf32>
    %364 = arith.mulf %336, %363 : vector<1x128xf32>
    %365 = arith.addf %362, %364 : vector<1x128xf32>
    %366 = vector.broadcast %150 : f32 to vector<1x128xf32>
    %367 = arith.addf %365, %366 : vector<1x128xf32>
    %cst_11 = arith.constant 0.000000e+00 : f32
    %368 = vector.broadcast %cst_11 : f32 to vector<1x128xf32>
    %369 = arith.maximumf %367, %368 : vector<1x128xf32>
    %370 = vector.broadcast %60 : f32 to vector<1x128xf32>
    %371 = arith.mulf %201, %370 : vector<1x128xf32>
    %372 = vector.broadcast %61 : f32 to vector<1x128xf32>
    %373 = arith.mulf %216, %372 : vector<1x128xf32>
    %374 = arith.addf %371, %373 : vector<1x128xf32>
    %375 = vector.broadcast %62 : f32 to vector<1x128xf32>
    %376 = arith.mulf %231, %375 : vector<1x128xf32>
    %377 = arith.addf %374, %376 : vector<1x128xf32>
    %378 = vector.broadcast %63 : f32 to vector<1x128xf32>
    %379 = arith.mulf %246, %378 : vector<1x128xf32>
    %380 = arith.addf %377, %379 : vector<1x128xf32>
    %381 = vector.broadcast %64 : f32 to vector<1x128xf32>
    %382 = arith.mulf %261, %381 : vector<1x128xf32>
    %383 = arith.addf %380, %382 : vector<1x128xf32>
    %384 = vector.broadcast %65 : f32 to vector<1x128xf32>
    %385 = arith.mulf %276, %384 : vector<1x128xf32>
    %386 = arith.addf %383, %385 : vector<1x128xf32>
    %387 = vector.broadcast %66 : f32 to vector<1x128xf32>
    %388 = arith.mulf %291, %387 : vector<1x128xf32>
    %389 = arith.addf %386, %388 : vector<1x128xf32>
    %390 = vector.broadcast %67 : f32 to vector<1x128xf32>
    %391 = arith.mulf %306, %390 : vector<1x128xf32>
    %392 = arith.addf %389, %391 : vector<1x128xf32>
    %393 = vector.broadcast %68 : f32 to vector<1x128xf32>
    %394 = arith.mulf %321, %393 : vector<1x128xf32>
    %395 = arith.addf %392, %394 : vector<1x128xf32>
    %396 = vector.broadcast %69 : f32 to vector<1x128xf32>
    %397 = arith.mulf %336, %396 : vector<1x128xf32>
    %398 = arith.addf %395, %397 : vector<1x128xf32>
    %399 = vector.broadcast %151 : f32 to vector<1x128xf32>
    %400 = arith.addf %398, %399 : vector<1x128xf32>
    %cst_12 = arith.constant 0.000000e+00 : f32
    %401 = vector.broadcast %cst_12 : f32 to vector<1x128xf32>
    %402 = arith.maximumf %400, %401 : vector<1x128xf32>
    %403 = vector.broadcast %70 : f32 to vector<1x128xf32>
    %404 = arith.mulf %201, %403 : vector<1x128xf32>
    %405 = vector.broadcast %71 : f32 to vector<1x128xf32>
    %406 = arith.mulf %216, %405 : vector<1x128xf32>
    %407 = arith.addf %404, %406 : vector<1x128xf32>
    %408 = vector.broadcast %72 : f32 to vector<1x128xf32>
    %409 = arith.mulf %231, %408 : vector<1x128xf32>
    %410 = arith.addf %407, %409 : vector<1x128xf32>
    %411 = vector.broadcast %73 : f32 to vector<1x128xf32>
    %412 = arith.mulf %246, %411 : vector<1x128xf32>
    %413 = arith.addf %410, %412 : vector<1x128xf32>
    %414 = vector.broadcast %74 : f32 to vector<1x128xf32>
    %415 = arith.mulf %261, %414 : vector<1x128xf32>
    %416 = arith.addf %413, %415 : vector<1x128xf32>
    %417 = vector.broadcast %75 : f32 to vector<1x128xf32>
    %418 = arith.mulf %276, %417 : vector<1x128xf32>
    %419 = arith.addf %416, %418 : vector<1x128xf32>
    %420 = vector.broadcast %76 : f32 to vector<1x128xf32>
    %421 = arith.mulf %291, %420 : vector<1x128xf32>
    %422 = arith.addf %419, %421 : vector<1x128xf32>
    %423 = vector.broadcast %77 : f32 to vector<1x128xf32>
    %424 = arith.mulf %306, %423 : vector<1x128xf32>
    %425 = arith.addf %422, %424 : vector<1x128xf32>
    %426 = vector.broadcast %78 : f32 to vector<1x128xf32>
    %427 = arith.mulf %321, %426 : vector<1x128xf32>
    %428 = arith.addf %425, %427 : vector<1x128xf32>
    %429 = vector.broadcast %79 : f32 to vector<1x128xf32>
    %430 = arith.mulf %336, %429 : vector<1x128xf32>
    %431 = arith.addf %428, %430 : vector<1x128xf32>
    %432 = vector.broadcast %152 : f32 to vector<1x128xf32>
    %433 = arith.addf %431, %432 : vector<1x128xf32>
    %cst_13 = arith.constant 0.000000e+00 : f32
    %434 = vector.broadcast %cst_13 : f32 to vector<1x128xf32>
    %435 = arith.maximumf %433, %434 : vector<1x128xf32>
    %436 = vector.broadcast %80 : f32 to vector<1x128xf32>
    %437 = arith.mulf %201, %436 : vector<1x128xf32>
    %438 = vector.broadcast %81 : f32 to vector<1x128xf32>
    %439 = arith.mulf %216, %438 : vector<1x128xf32>
    %440 = arith.addf %437, %439 : vector<1x128xf32>
    %441 = vector.broadcast %82 : f32 to vector<1x128xf32>
    %442 = arith.mulf %231, %441 : vector<1x128xf32>
    %443 = arith.addf %440, %442 : vector<1x128xf32>
    %444 = vector.broadcast %83 : f32 to vector<1x128xf32>
    %445 = arith.mulf %246, %444 : vector<1x128xf32>
    %446 = arith.addf %443, %445 : vector<1x128xf32>
    %447 = vector.broadcast %84 : f32 to vector<1x128xf32>
    %448 = arith.mulf %261, %447 : vector<1x128xf32>
    %449 = arith.addf %446, %448 : vector<1x128xf32>
    %450 = vector.broadcast %85 : f32 to vector<1x128xf32>
    %451 = arith.mulf %276, %450 : vector<1x128xf32>
    %452 = arith.addf %449, %451 : vector<1x128xf32>
    %453 = vector.broadcast %86 : f32 to vector<1x128xf32>
    %454 = arith.mulf %291, %453 : vector<1x128xf32>
    %455 = arith.addf %452, %454 : vector<1x128xf32>
    %456 = vector.broadcast %87 : f32 to vector<1x128xf32>
    %457 = arith.mulf %306, %456 : vector<1x128xf32>
    %458 = arith.addf %455, %457 : vector<1x128xf32>
    %459 = vector.broadcast %88 : f32 to vector<1x128xf32>
    %460 = arith.mulf %321, %459 : vector<1x128xf32>
    %461 = arith.addf %458, %460 : vector<1x128xf32>
    %462 = vector.broadcast %89 : f32 to vector<1x128xf32>
    %463 = arith.mulf %336, %462 : vector<1x128xf32>
    %464 = arith.addf %461, %463 : vector<1x128xf32>
    %465 = vector.broadcast %153 : f32 to vector<1x128xf32>
    %466 = arith.addf %464, %465 : vector<1x128xf32>
    %cst_14 = arith.constant 0.000000e+00 : f32
    %467 = vector.broadcast %cst_14 : f32 to vector<1x128xf32>
    %468 = arith.maximumf %466, %467 : vector<1x128xf32>
    %469 = vector.broadcast %90 : f32 to vector<1x128xf32>
    %470 = arith.mulf %201, %469 : vector<1x128xf32>
    %471 = vector.broadcast %91 : f32 to vector<1x128xf32>
    %472 = arith.mulf %216, %471 : vector<1x128xf32>
    %473 = arith.addf %470, %472 : vector<1x128xf32>
    %474 = vector.broadcast %92 : f32 to vector<1x128xf32>
    %475 = arith.mulf %231, %474 : vector<1x128xf32>
    %476 = arith.addf %473, %475 : vector<1x128xf32>
    %477 = vector.broadcast %93 : f32 to vector<1x128xf32>
    %478 = arith.mulf %246, %477 : vector<1x128xf32>
    %479 = arith.addf %476, %478 : vector<1x128xf32>
    %480 = vector.broadcast %94 : f32 to vector<1x128xf32>
    %481 = arith.mulf %261, %480 : vector<1x128xf32>
    %482 = arith.addf %479, %481 : vector<1x128xf32>
    %483 = vector.broadcast %95 : f32 to vector<1x128xf32>
    %484 = arith.mulf %276, %483 : vector<1x128xf32>
    %485 = arith.addf %482, %484 : vector<1x128xf32>
    %486 = vector.broadcast %96 : f32 to vector<1x128xf32>
    %487 = arith.mulf %291, %486 : vector<1x128xf32>
    %488 = arith.addf %485, %487 : vector<1x128xf32>
    %489 = vector.broadcast %97 : f32 to vector<1x128xf32>
    %490 = arith.mulf %306, %489 : vector<1x128xf32>
    %491 = arith.addf %488, %490 : vector<1x128xf32>
    %492 = vector.broadcast %98 : f32 to vector<1x128xf32>
    %493 = arith.mulf %321, %492 : vector<1x128xf32>
    %494 = arith.addf %491, %493 : vector<1x128xf32>
    %495 = vector.broadcast %99 : f32 to vector<1x128xf32>
    %496 = arith.mulf %336, %495 : vector<1x128xf32>
    %497 = arith.addf %494, %496 : vector<1x128xf32>
    %498 = vector.broadcast %154 : f32 to vector<1x128xf32>
    %499 = arith.addf %497, %498 : vector<1x128xf32>
    %cst_15 = arith.constant 0.000000e+00 : f32
    %500 = vector.broadcast %cst_15 : f32 to vector<1x128xf32>
    %501 = arith.maximumf %499, %500 : vector<1x128xf32>
    %502 = vector.broadcast %100 : f32 to vector<1x128xf32>
    %503 = arith.mulf %201, %502 : vector<1x128xf32>
    %504 = vector.broadcast %101 : f32 to vector<1x128xf32>
    %505 = arith.mulf %216, %504 : vector<1x128xf32>
    %506 = arith.addf %503, %505 : vector<1x128xf32>
    %507 = vector.broadcast %102 : f32 to vector<1x128xf32>
    %508 = arith.mulf %231, %507 : vector<1x128xf32>
    %509 = arith.addf %506, %508 : vector<1x128xf32>
    %510 = vector.broadcast %103 : f32 to vector<1x128xf32>
    %511 = arith.mulf %246, %510 : vector<1x128xf32>
    %512 = arith.addf %509, %511 : vector<1x128xf32>
    %513 = vector.broadcast %104 : f32 to vector<1x128xf32>
    %514 = arith.mulf %261, %513 : vector<1x128xf32>
    %515 = arith.addf %512, %514 : vector<1x128xf32>
    %516 = vector.broadcast %105 : f32 to vector<1x128xf32>
    %517 = arith.mulf %276, %516 : vector<1x128xf32>
    %518 = arith.addf %515, %517 : vector<1x128xf32>
    %519 = vector.broadcast %106 : f32 to vector<1x128xf32>
    %520 = arith.mulf %291, %519 : vector<1x128xf32>
    %521 = arith.addf %518, %520 : vector<1x128xf32>
    %522 = vector.broadcast %107 : f32 to vector<1x128xf32>
    %523 = arith.mulf %306, %522 : vector<1x128xf32>
    %524 = arith.addf %521, %523 : vector<1x128xf32>
    %525 = vector.broadcast %108 : f32 to vector<1x128xf32>
    %526 = arith.mulf %321, %525 : vector<1x128xf32>
    %527 = arith.addf %524, %526 : vector<1x128xf32>
    %528 = vector.broadcast %109 : f32 to vector<1x128xf32>
    %529 = arith.mulf %336, %528 : vector<1x128xf32>
    %530 = arith.addf %527, %529 : vector<1x128xf32>
    %531 = vector.broadcast %155 : f32 to vector<1x128xf32>
    %532 = arith.addf %530, %531 : vector<1x128xf32>
    %cst_16 = arith.constant 0.000000e+00 : f32
    %533 = vector.broadcast %cst_16 : f32 to vector<1x128xf32>
    %534 = arith.maximumf %532, %533 : vector<1x128xf32>
    %535 = vector.broadcast %110 : f32 to vector<1x128xf32>
    %536 = arith.mulf %201, %535 : vector<1x128xf32>
    %537 = vector.broadcast %111 : f32 to vector<1x128xf32>
    %538 = arith.mulf %216, %537 : vector<1x128xf32>
    %539 = arith.addf %536, %538 : vector<1x128xf32>
    %540 = vector.broadcast %112 : f32 to vector<1x128xf32>
    %541 = arith.mulf %231, %540 : vector<1x128xf32>
    %542 = arith.addf %539, %541 : vector<1x128xf32>
    %543 = vector.broadcast %113 : f32 to vector<1x128xf32>
    %544 = arith.mulf %246, %543 : vector<1x128xf32>
    %545 = arith.addf %542, %544 : vector<1x128xf32>
    %546 = vector.broadcast %114 : f32 to vector<1x128xf32>
    %547 = arith.mulf %261, %546 : vector<1x128xf32>
    %548 = arith.addf %545, %547 : vector<1x128xf32>
    %549 = vector.broadcast %115 : f32 to vector<1x128xf32>
    %550 = arith.mulf %276, %549 : vector<1x128xf32>
    %551 = arith.addf %548, %550 : vector<1x128xf32>
    %552 = vector.broadcast %116 : f32 to vector<1x128xf32>
    %553 = arith.mulf %291, %552 : vector<1x128xf32>
    %554 = arith.addf %551, %553 : vector<1x128xf32>
    %555 = vector.broadcast %117 : f32 to vector<1x128xf32>
    %556 = arith.mulf %306, %555 : vector<1x128xf32>
    %557 = arith.addf %554, %556 : vector<1x128xf32>
    %558 = vector.broadcast %118 : f32 to vector<1x128xf32>
    %559 = arith.mulf %321, %558 : vector<1x128xf32>
    %560 = arith.addf %557, %559 : vector<1x128xf32>
    %561 = vector.broadcast %119 : f32 to vector<1x128xf32>
    %562 = arith.mulf %336, %561 : vector<1x128xf32>
    %563 = arith.addf %560, %562 : vector<1x128xf32>
    %564 = vector.broadcast %156 : f32 to vector<1x128xf32>
    %565 = arith.addf %563, %564 : vector<1x128xf32>
    %cst_17 = arith.constant 0.000000e+00 : f32
    %566 = vector.broadcast %cst_17 : f32 to vector<1x128xf32>
    %567 = arith.maximumf %565, %566 : vector<1x128xf32>
    %568 = vector.broadcast %120 : f32 to vector<1x128xf32>
    %569 = arith.mulf %201, %568 : vector<1x128xf32>
    %570 = vector.broadcast %121 : f32 to vector<1x128xf32>
    %571 = arith.mulf %216, %570 : vector<1x128xf32>
    %572 = arith.addf %569, %571 : vector<1x128xf32>
    %573 = vector.broadcast %122 : f32 to vector<1x128xf32>
    %574 = arith.mulf %231, %573 : vector<1x128xf32>
    %575 = arith.addf %572, %574 : vector<1x128xf32>
    %576 = vector.broadcast %123 : f32 to vector<1x128xf32>
    %577 = arith.mulf %246, %576 : vector<1x128xf32>
    %578 = arith.addf %575, %577 : vector<1x128xf32>
    %579 = vector.broadcast %124 : f32 to vector<1x128xf32>
    %580 = arith.mulf %261, %579 : vector<1x128xf32>
    %581 = arith.addf %578, %580 : vector<1x128xf32>
    %582 = vector.broadcast %125 : f32 to vector<1x128xf32>
    %583 = arith.mulf %276, %582 : vector<1x128xf32>
    %584 = arith.addf %581, %583 : vector<1x128xf32>
    %585 = vector.broadcast %126 : f32 to vector<1x128xf32>
    %586 = arith.mulf %291, %585 : vector<1x128xf32>
    %587 = arith.addf %584, %586 : vector<1x128xf32>
    %588 = vector.broadcast %127 : f32 to vector<1x128xf32>
    %589 = arith.mulf %306, %588 : vector<1x128xf32>
    %590 = arith.addf %587, %589 : vector<1x128xf32>
    %591 = vector.broadcast %128 : f32 to vector<1x128xf32>
    %592 = arith.mulf %321, %591 : vector<1x128xf32>
    %593 = arith.addf %590, %592 : vector<1x128xf32>
    %594 = vector.broadcast %129 : f32 to vector<1x128xf32>
    %595 = arith.mulf %336, %594 : vector<1x128xf32>
    %596 = arith.addf %593, %595 : vector<1x128xf32>
    %597 = vector.broadcast %157 : f32 to vector<1x128xf32>
    %598 = arith.addf %596, %597 : vector<1x128xf32>
    %cst_18 = arith.constant 0.000000e+00 : f32
    %599 = vector.broadcast %cst_18 : f32 to vector<1x128xf32>
    %600 = arith.maximumf %598, %599 : vector<1x128xf32>
    %601 = vector.broadcast %130 : f32 to vector<1x128xf32>
    %602 = arith.mulf %201, %601 : vector<1x128xf32>
    %603 = vector.broadcast %131 : f32 to vector<1x128xf32>
    %604 = arith.mulf %216, %603 : vector<1x128xf32>
    %605 = arith.addf %602, %604 : vector<1x128xf32>
    %606 = vector.broadcast %132 : f32 to vector<1x128xf32>
    %607 = arith.mulf %231, %606 : vector<1x128xf32>
    %608 = arith.addf %605, %607 : vector<1x128xf32>
    %609 = vector.broadcast %133 : f32 to vector<1x128xf32>
    %610 = arith.mulf %246, %609 : vector<1x128xf32>
    %611 = arith.addf %608, %610 : vector<1x128xf32>
    %612 = vector.broadcast %134 : f32 to vector<1x128xf32>
    %613 = arith.mulf %261, %612 : vector<1x128xf32>
    %614 = arith.addf %611, %613 : vector<1x128xf32>
    %615 = vector.broadcast %135 : f32 to vector<1x128xf32>
    %616 = arith.mulf %276, %615 : vector<1x128xf32>
    %617 = arith.addf %614, %616 : vector<1x128xf32>
    %618 = vector.broadcast %136 : f32 to vector<1x128xf32>
    %619 = arith.mulf %291, %618 : vector<1x128xf32>
    %620 = arith.addf %617, %619 : vector<1x128xf32>
    %621 = vector.broadcast %137 : f32 to vector<1x128xf32>
    %622 = arith.mulf %306, %621 : vector<1x128xf32>
    %623 = arith.addf %620, %622 : vector<1x128xf32>
    %624 = vector.broadcast %138 : f32 to vector<1x128xf32>
    %625 = arith.mulf %321, %624 : vector<1x128xf32>
    %626 = arith.addf %623, %625 : vector<1x128xf32>
    %627 = vector.broadcast %139 : f32 to vector<1x128xf32>
    %628 = arith.mulf %336, %627 : vector<1x128xf32>
    %629 = arith.addf %626, %628 : vector<1x128xf32>
    %630 = vector.broadcast %158 : f32 to vector<1x128xf32>
    %631 = arith.addf %629, %630 : vector<1x128xf32>
    %cst_19 = arith.constant 0.000000e+00 : f32
    %632 = vector.broadcast %cst_19 : f32 to vector<1x128xf32>
    %633 = arith.maximumf %631, %632 : vector<1x128xf32>
    %634 = vector.broadcast %140 : f32 to vector<1x128xf32>
    %635 = arith.mulf %201, %634 : vector<1x128xf32>
    %636 = vector.broadcast %141 : f32 to vector<1x128xf32>
    %637 = arith.mulf %216, %636 : vector<1x128xf32>
    %638 = arith.addf %635, %637 : vector<1x128xf32>
    %639 = vector.broadcast %142 : f32 to vector<1x128xf32>
    %640 = arith.mulf %231, %639 : vector<1x128xf32>
    %641 = arith.addf %638, %640 : vector<1x128xf32>
    %642 = vector.broadcast %143 : f32 to vector<1x128xf32>
    %643 = arith.mulf %246, %642 : vector<1x128xf32>
    %644 = arith.addf %641, %643 : vector<1x128xf32>
    %645 = vector.broadcast %144 : f32 to vector<1x128xf32>
    %646 = arith.mulf %261, %645 : vector<1x128xf32>
    %647 = arith.addf %644, %646 : vector<1x128xf32>
    %648 = vector.broadcast %145 : f32 to vector<1x128xf32>
    %649 = arith.mulf %276, %648 : vector<1x128xf32>
    %650 = arith.addf %647, %649 : vector<1x128xf32>
    %651 = vector.broadcast %146 : f32 to vector<1x128xf32>
    %652 = arith.mulf %291, %651 : vector<1x128xf32>
    %653 = arith.addf %650, %652 : vector<1x128xf32>
    %654 = vector.broadcast %147 : f32 to vector<1x128xf32>
    %655 = arith.mulf %306, %654 : vector<1x128xf32>
    %656 = arith.addf %653, %655 : vector<1x128xf32>
    %657 = vector.broadcast %148 : f32 to vector<1x128xf32>
    %658 = arith.mulf %321, %657 : vector<1x128xf32>
    %659 = arith.addf %656, %658 : vector<1x128xf32>
    %660 = vector.broadcast %149 : f32 to vector<1x128xf32>
    %661 = arith.mulf %336, %660 : vector<1x128xf32>
    %662 = arith.addf %659, %661 : vector<1x128xf32>
    %663 = vector.broadcast %159 : f32 to vector<1x128xf32>
    %664 = arith.addf %662, %663 : vector<1x128xf32>
    %cst_20 = arith.constant 0.000000e+00 : f32
    %665 = vector.broadcast %cst_20 : f32 to vector<1x128xf32>
    %666 = arith.maximumf %664, %665 : vector<1x128xf32>
    %667 = vector.broadcast %160 : f32 to vector<1x128xf32>
    %668 = arith.mulf %369, %667 : vector<1x128xf32>
    %669 = vector.broadcast %161 : f32 to vector<1x128xf32>
    %670 = arith.mulf %402, %669 : vector<1x128xf32>
    %671 = arith.addf %668, %670 : vector<1x128xf32>
    %672 = vector.broadcast %162 : f32 to vector<1x128xf32>
    %673 = arith.mulf %435, %672 : vector<1x128xf32>
    %674 = arith.addf %671, %673 : vector<1x128xf32>
    %675 = vector.broadcast %163 : f32 to vector<1x128xf32>
    %676 = arith.mulf %468, %675 : vector<1x128xf32>
    %677 = arith.addf %674, %676 : vector<1x128xf32>
    %678 = vector.broadcast %164 : f32 to vector<1x128xf32>
    %679 = arith.mulf %501, %678 : vector<1x128xf32>
    %680 = arith.addf %677, %679 : vector<1x128xf32>
    %681 = vector.broadcast %165 : f32 to vector<1x128xf32>
    %682 = arith.mulf %534, %681 : vector<1x128xf32>
    %683 = arith.addf %680, %682 : vector<1x128xf32>
    %684 = vector.broadcast %166 : f32 to vector<1x128xf32>
    %685 = arith.mulf %567, %684 : vector<1x128xf32>
    %686 = arith.addf %683, %685 : vector<1x128xf32>
    %687 = vector.broadcast %167 : f32 to vector<1x128xf32>
    %688 = arith.mulf %600, %687 : vector<1x128xf32>
    %689 = arith.addf %686, %688 : vector<1x128xf32>
    %690 = vector.broadcast %168 : f32 to vector<1x128xf32>
    %691 = arith.mulf %633, %690 : vector<1x128xf32>
    %692 = arith.addf %689, %691 : vector<1x128xf32>
    %693 = vector.broadcast %169 : f32 to vector<1x128xf32>
    %694 = arith.mulf %666, %693 : vector<1x128xf32>
    %695 = arith.addf %692, %694 : vector<1x128xf32>
    %696 = vector.broadcast %180 : f32 to vector<1x128xf32>
    %697 = arith.addf %695, %696 : vector<1x128xf32>
    %698 = vector.broadcast %170 : f32 to vector<1x128xf32>
    %699 = arith.mulf %369, %698 : vector<1x128xf32>
    %700 = vector.broadcast %171 : f32 to vector<1x128xf32>
    %701 = arith.mulf %402, %700 : vector<1x128xf32>
    %702 = arith.addf %699, %701 : vector<1x128xf32>
    %703 = vector.broadcast %172 : f32 to vector<1x128xf32>
    %704 = arith.mulf %435, %703 : vector<1x128xf32>
    %705 = arith.addf %702, %704 : vector<1x128xf32>
    %706 = vector.broadcast %173 : f32 to vector<1x128xf32>
    %707 = arith.mulf %468, %706 : vector<1x128xf32>
    %708 = arith.addf %705, %707 : vector<1x128xf32>
    %709 = vector.broadcast %174 : f32 to vector<1x128xf32>
    %710 = arith.mulf %501, %709 : vector<1x128xf32>
    %711 = arith.addf %708, %710 : vector<1x128xf32>
    %712 = vector.broadcast %175 : f32 to vector<1x128xf32>
    %713 = arith.mulf %534, %712 : vector<1x128xf32>
    %714 = arith.addf %711, %713 : vector<1x128xf32>
    %715 = vector.broadcast %176 : f32 to vector<1x128xf32>
    %716 = arith.mulf %567, %715 : vector<1x128xf32>
    %717 = arith.addf %714, %716 : vector<1x128xf32>
    %718 = vector.broadcast %177 : f32 to vector<1x128xf32>
    %719 = arith.mulf %600, %718 : vector<1x128xf32>
    %720 = arith.addf %717, %719 : vector<1x128xf32>
    %721 = vector.broadcast %178 : f32 to vector<1x128xf32>
    %722 = arith.mulf %633, %721 : vector<1x128xf32>
    %723 = arith.addf %720, %722 : vector<1x128xf32>
    %724 = vector.broadcast %179 : f32 to vector<1x128xf32>
    %725 = arith.mulf %666, %724 : vector<1x128xf32>
    %726 = arith.addf %723, %725 : vector<1x128xf32>
    %727 = vector.broadcast %181 : f32 to vector<1x128xf32>
    %728 = arith.addf %726, %727 : vector<1x128xf32>
    %729 = tpu.concatenate %697, %728 in 0 : vector<1x128xf32>, vector<1x128xf32> -> vector<2x128xf32>
    %c0_21 = arith.constant 0 : index
    %c0_22 = arith.constant 0 : index
    %730 = vector.load %arg3[%c0_21, %c0_22] : memref<2x128xf32, #tpu.memory_space<vmem>>, vector<2x128xf32>
    tpu.vector_store %arg3[%c0_21, %c0_22], %729 {strides = array<i32>} : memref<2x128xf32, #tpu.memory_space<vmem>>, vector<2x128xf32>,
    return
  }
  func.func @transform_0(%arg0: i32) -> i32 {
    %c0_i32 = arith.constant 0 : i32
    %c0_i32_0 = arith.constant 0 : i32
    return %c0_i32 : i32
  }
  func.func @transform_1(%arg0: i32) -> (i32, i32) {
    %c0_i32 = arith.constant 0 : i32
    %c0_i32_0 = arith.constant 0 : i32
    return %c0_i32, %arg0 : i32, i32
  }
  func.func @transform_2(%arg0: i32) -> (i32, i32) {
    %c0_i32 = arith.constant 0 : i32
    %c0_i32_0 = arith.constant 0 : i32
    return %c0_i32, %arg0 : i32, i32
  }
}

</mosaic_0001>

<llo_original>
// kernel: neural_network_forward.1
$region0: #{neural_network_forward.1}
  #allocation0 [shape = 'u32[]', space=smem, size = 0x4, offset = 0x4, fixed_abs, tag = 'smem constant byte address 0x4 - core index']
  #allocation1 [shape = 'u32[144,128]{1,0:T(1,128)}', space=vmem, size = 0x12000, scoped, tag = 'internal scratch']
  %s0 = inlined_call_operand.vmem [shape: f32[182], index: 0, kind: input, shape index: {}]
  %s1 = inlined_call_operand.vmem [shape: f32[4,128], index: 1, kind: input, shape index: {}]
  %s2 = inlined_call_operand.vmem [shape: f32[2,128], index: 2, kind: output, shape index: {}]
  %s3 = sld [smem:[#allocation0]]
  $region22: #{neural_network_forward.1} parent=0
    _
  %s5 = ssub.s32 1, %s3
  %s6 = scalar_select 0, %s5, %s3
  $region1: #{neural_network_forward.1} parent=0
    #allocation2 [shape = 'u8[1024]{0}', space=smem, size = 0x400, scoped, tag = 'input window, operand 0, single buffered']
    #allocation3 [shape = 's32[1]{0}', space=sflag, size = 0x4, scoped, tag = 'scoped memory for neural_network_forward.1']
    %7 = vsyncpa [#allocation3], 0
    // Predicated region
    $region2: #{neural_network_forward.1} parent=1 // pred_check
      _
    $region3: #{neural_network_forward.1} parent=1 // pred_check_branch
      %9 = sbr.rel (0) target = $region5
    $region4: #{neural_network_forward.1} parent=1 // pred_region
      %s11 = ssub.s32 32, 32
      %12 = vsyncadd [#allocation3], %s11
      %s14 = sshll.u32 %s0, 4
      %s15 = int_to_ptr.vmem [resolvable:$true] %s14
      %17 = dma.vmem_to_smem %s15, 32, [#allocation2], [#allocation3]
    $region5: #{neural_network_forward.1} parent=1 // pred_fallthru
      _
    // Predicated region
    $region6: #{neural_network_forward.1} parent=1 // pred_check
      _
    $region7: #{neural_network_forward.1} parent=1 // pred_check_branch
      %19 = sbr.rel (0) target = $region9
    $region8: #{neural_network_forward.1} parent=1 // pred_region
      _
    $region9: #{neural_network_forward.1} parent=1 // pred_fallthru
      _
    // Predicated region
    $region10: #{neural_network_forward.1} parent=1 // pred_check
      _
    $region11: #{neural_network_forward.1} parent=1 // pred_check_branch
      %21 = sbr.rel (0) target = $region13
    $region12: #{neural_network_forward.1} parent=1 // pred_region
      %22 = dma.done [#allocation3], 32
    $region13: #{neural_network_forward.1} parent=1 // pred_fallthru
      _
    %23 = sfence
    %s24 = sld [smem:[#allocation2]]
    %s25 = sld [smem:[#allocation2 + $0x1]]
    %s26 = sld [smem:[#allocation2 + $0x2]]
    %s27 = sld [smem:[#allocation2 + $0x3]]
    %s28 = sld [smem:[#allocation2 + $0x4]]
    %s29 = sld [smem:[#allocation2 + $0x5]]
    %s30 = sld [smem:[#allocation2 + $0x6]]
    %s31 = sld [smem:[#allocation2 + $0x7]]
    %s32 = sld [smem:[#allocation2 + $0x8]]
    %s33 = sld [smem:[#allocation2 + $0x9]]
    %s34 = sld [smem:[#allocation2 + $0xa]]
    %s35 = sld [smem:[#allocation2 + $0xb]]
    %s36 = sld [smem:[#allocation2 + $0xc]]
    %s37 = sld [smem:[#allocation2 + $0xd]]
    %s38 = sld [smem:[#allocation2 + $0xe]]
    %s39 = sld [smem:[#allocation2 + $0xf]]
    %s40 = sld [smem:[#allocation2 + $0x10]]
    %s41 = sld [smem:[#allocation2 + $0x11]]
    %s42 = sld [smem:[#allocation2 + $0x12]]
    %s43 = sld [smem:[#allocation2 + $0x13]]
    %s44 = sld [smem:[#allocation2 + $0x14]]
    %s45 = sld [smem:[#allocation2 + $0x15]]
    %s46 = sld [smem:[#allocation2 + $0x16]]
    %s47 = sld [smem:[#allocation2 + $0x17]]
    %s48 = sld [smem:[#allocation2 + $0x18]]
    %s49 = sld [smem:[#allocation2 + $0x19]]
    %s50 = sld [smem:[#allocation2 + $0x1a]]
    %s51 = sld [smem:[#allocation2 + $0x1b]]
    %s52 = sld [smem:[#allocation2 + $0x1c]]
    %s53 = sld [smem:[#allocation2 + $0x1d]]
    %s54 = sld [smem:[#allocation2 + $0x1e]]
    %s55 = sld [smem:[#allocation2 + $0x1f]]
    %s56 = sld [smem:[#allocation2 + $0x20]]
    %s57 = sld [smem:[#allocation2 + $0x21]]
    %s58 = sld [smem:[#allocation2 + $0x22]]
    %s59 = sld [smem:[#allocation2 + $0x23]]
    %s60 = sld [smem:[#allocation2 + $0x24]]
    %s61 = sld [smem:[#allocation2 + $0x25]]
    %s62 = sld [smem:[#allocation2 + $0x26]]
    %s63 = sld [smem:[#allocation2 + $0x27]]
    %s64 = sld [smem:[#allocation2 + $0x28]]
    %s65 = sld [smem:[#allocation2 + $0x29]]
    %s66 = sld [smem:[#allocation2 + $0x2a]]
    %s67 = sld [smem:[#allocation2 + $0x2b]]
    %s68 = sld [smem:[#allocation2 + $0x2c]]
    %s69 = sld [smem:[#allocation2 + $0x2d]]
    %s70 = sld [smem:[#allocation2 + $0x2e]]
    %s71 = sld [smem:[#allocation2 + $0x2f]]
    %s72 = sld [smem:[#allocation2 + $0x30]]
    %s73 = sld [smem:[#allocation2 + $0x31]]
    %s74 = sld [smem:[#allocation2 + $0x32]]
    %s75 = sld [smem:[#allocation2 + $0x33]]
    %s76 = sld [smem:[#allocation2 + $0x34]]
    %s77 = sld [smem:[#allocation2 + $0x35]]
    %s78 = sld [smem:[#allocation2 + $0x36]]
    %s79 = sld [smem:[#allocation2 + $0x37]]
    %s80 = sld [smem:[#allocation2 + $0x38]]
    %s81 = sld [smem:[#allocation2 + $0x39]]
    %s82 = sld [smem:[#allocation2 + $0x3a]]
    %s83 = sld [smem:[#allocation2 + $0x3b]]
    %s84 = sld [smem:[#allocation2 + $0x3c]]
    %s85 = sld [smem:[#allocation2 + $0x3d]]
    %s86 = sld [smem:[#allocation2 + $0x3e]]
    %s87 = sld [smem:[#allocation2 + $0x3f]]
    %s88 = sld [smem:[#allocation2 + $0x40]]
    %s89 = sld [smem:[#allocation2 + $0x41]]
    %s90 = sld [smem:[#allocation2 + $0x42]]
    %s91 = sld [smem:[#allocation2 + $0x43]]
    %s92 = sld [smem:[#allocation2 + $0x44]]
    %s93 = sld [smem:[#allocation2 + $0x45]]
    %s94 = sld [smem:[#allocation2 + $0x46]]
    %s95 = sld [smem:[#allocation2 + $0x47]]
    %s96 = sld [smem:[#allocation2 + $0x48]]
    %s97 = sld [smem:[#allocation2 + $0x49]]
    %s98 = sld [smem:[#allocation2 + $0x4a]]
    %s99 = sld [smem:[#allocation2 + $0x4b]]
    %s100 = sld [smem:[#allocation2 + $0x4c]]
    %s101 = sld [smem:[#allocation2 + $0x4d]]
    %s102 = sld [smem:[#allocation2 + $0x4e]]
    %s103 = sld [smem:[#allocation2 + $0x4f]]
    %s104 = sld [smem:[#allocation2 + $0x50]]
    %s105 = sld [smem:[#allocation2 + $0x51]]
    %s106 = sld [smem:[#allocation2 + $0x52]]
    %s107 = sld [smem:[#allocation2 + $0x53]]
    %s108 = sld [smem:[#allocation2 + $0x54]]
    %s109 = sld [smem:[#allocation2 + $0x55]]
    %s110 = sld [smem:[#allocation2 + $0x56]]
    %s111 = sld [smem:[#allocation2 + $0x57]]
    %s112 = sld [smem:[#allocation2 + $0x58]]
    %s113 = sld [smem:[#allocation2 + $0x59]]
    %s114 = sld [smem:[#allocation2 + $0x5a]]
    %s115 = sld [smem:[#allocation2 + $0x5b]]
    %s116 = sld [smem:[#allocation2 + $0x5c]]
    %s117 = sld [smem:[#allocation2 + $0x5d]]
    %s118 = sld [smem:[#allocation2 + $0x5e]]
    %s119 = sld [smem:[#allocation2 + $0x5f]]
    %s120 = sld [smem:[#allocation2 + $0x60]]
    %s121 = sld [smem:[#allocation2 + $0x61]]
    %s122 = sld [smem:[#allocation2 + $0x62]]
    %s123 = sld [smem:[#allocation2 + $0x63]]
    %s124 = sld [smem:[#allocation2 + $0x64]]
    %s125 = sld [smem:[#allocation2 + $0x65]]
    %s126 = sld [smem:[#allocation2 + $0x66]]
    %s127 = sld [smem:[#allocation2 + $0x67]]
    %s128 = sld [smem:[#allocation2 + $0x68]]
    %s129 = sld [smem:[#allocation2 + $0x69]]
    %s130 = sld [smem:[#allocation2 + $0x6a]]
    %s131 = sld [smem:[#allocation2 + $0x6b]]
    %s132 = sld [smem:[#allocation2 + $0x6c]]
    %s133 = sld [smem:[#allocation2 + $0x6d]]
    %s134 = sld [smem:[#allocation2 + $0x6e]]
    %s135 = sld [smem:[#allocation2 + $0x6f]]
    %s136 = sld [smem:[#allocation2 + $0x70]]
    %s137 = sld [smem:[#allocation2 + $0x71]]
    %s138 = sld [smem:[#allocation2 + $0x72]]
    %s139 = sld [smem:[#allocation2 + $0x73]]
    %s140 = sld [smem:[#allocation2 + $0x74]]
    %s141 = sld [smem:[#allocation2 + $0x75]]
    %s142 = sld [smem:[#allocation2 + $0x76]]
    %s143 = sld [smem:[#allocation2 + $0x77]]
    %s144 = sld [smem:[#allocation2 + $0x78]]
    %s145 = sld [smem:[#allocation2 + $0x79]]
    %s146 = sld [smem:[#allocation2 + $0x7a]]
    %s147 = sld [smem:[#allocation2 + $0x7b]]
    %s148 = sld [smem:[#allocation2 + $0x7c]]
    %s149 = sld [smem:[#allocation2 + $0x7d]]
    %s150 = sld [smem:[#allocation2 + $0x7e]]
    %s151 = sld [smem:[#allocation2 + $0x7f]]
    %s152 = sld [smem:[#allocation2 + $0x80]]
    %s153 = sld [smem:[#allocation2 + $0x81]]
    %s154 = sld [smem:[#allocation2 + $0x82]]
    %s155 = sld [smem:[#allocation2 + $0x83]]
    %s156 = sld [smem:[#allocation2 + $0x84]]
    %s157 = sld [smem:[#allocation2 + $0x85]]
    %s158 = sld [smem:[#allocation2 + $0x86]]
    %s159 = sld [smem:[#allocation2 + $0x87]]
    %s160 = sld [smem:[#allocation2 + $0x88]]
    %s161 = sld [smem:[#allocation2 + $0x89]]
    %s162 = sld [smem:[#allocation2 + $0x8a]]
    %s163 = sld [smem:[#allocation2 + $0x8b]]
    %s164 = sld [smem:[#allocation2 + $0x8c]]
    %s165 = sld [smem:[#allocation2 + $0x8d]]
    %s166 = sld [smem:[#allocation2 + $0x8e]]
    %s167 = sld [smem:[#allocation2 + $0x8f]]
    %s168 = sld [smem:[#allocation2 + $0x90]]
    %s169 = sld [smem:[#allocation2 + $0x91]]
    %s170 = sld [smem:[#allocation2 + $0x92]]
    %s171 = sld [smem:[#allocation2 + $0x93]]
    %s172 = sld [smem:[#allocation2 + $0x94]]
    %s173 = sld [smem:[#allocation2 + $0x95]]
    %s174 = sld [smem:[#allocation2 + $0x96]]
    %s175 = sld [smem:[#allocation2 + $0x97]]
    %s176 = sld [smem:[#allocation2 + $0x98]]
    %s177 = sld [smem:[#allocation2 + $0x99]]
    %s178 = sld [smem:[#allocation2 + $0x9a]]
    %s179 = sld [smem:[#allocation2 + $0x9b]]
    %s180 = sld [smem:[#allocation2 + $0x9c]]
    %s181 = sld [smem:[#allocation2 + $0x9d]]
    %s182 = sld [smem:[#allocation2 + $0x9e]]
    %s183 = sld [smem:[#allocation2 + $0x9f]]
    %s184 = sld [smem:[#allocation2 + $0xa0]]
    %s185 = sld [smem:[#allocation2 + $0xa1]]
    %s186 = sld [smem:[#allocation2 + $0xa2]]
    %s187 = sld [smem:[#allocation2 + $0xa3]]
    %s188 = sld [smem:[#allocation2 + $0xa4]]
    %s189 = sld [smem:[#allocation2 + $0xa5]]
    %s190 = sld [smem:[#allocation2 + $0xa6]]
    %s191 = sld [smem:[#allocation2 + $0xa7]]
    %s192 = sld [smem:[#allocation2 + $0xa8]]
    %s193 = sld [smem:[#allocation2 + $0xa9]]
    %s194 = sld [smem:[#allocation2 + $0xaa]]
    %s195 = sld [smem:[#allocation2 + $0xab]]
    %s196 = sld [smem:[#allocation2 + $0xac]]
    %s197 = sld [smem:[#allocation2 + $0xad]]
    %s198 = sld [smem:[#allocation2 + $0xae]]
    %s199 = sld [smem:[#allocation2 + $0xaf]]
    %s200 = sld [smem:[#allocation2 + $0xb0]]
    %s201 = sld [smem:[#allocation2 + $0xb1]]
    %s202 = sld [smem:[#allocation2 + $0xb2]]
    %s203 = sld [smem:[#allocation2 + $0xb3]]
    %s204 = sld [smem:[#allocation2 + $0xb4]]
    %s205 = sld [smem:[#allocation2 + $0xb5]]
    %v206 = vld [vmem:[%s1] sm:$0xf]
    %v207 = vstv %s24
    %v208 = vmul.f32 %v206, %v207
    %v209 = vstv %s25
    %v210 = vmul.f32 %v206, %v209
    %v212 = vrot.slane %v210, 1
    %v214 = vadd.f32 %v208, %v212
    %v215 = vstv %s26
    %v216 = vmul.f32 %v206, %v215
    %v218 = vrot.slane %v216, 2
    %v220 = vadd.f32 %v214, %v218
    %v221 = vstv %s27
    %v222 = vmul.f32 %v206, %v221
    %v224 = vrot.slane %v222, 3
    %v226 = vadd.f32 %v220, %v224
    %v227 = vstv %s64
    %v228 = vadd.f32 %v226, %v227
    %v229 = vmax.f32 %v228, 0.0
    %v230 = vstv %s28
    %v231 = vmul.f32 %v206, %v230
    %v232 = vstv %s29
    %v233 = vmul.f32 %v206, %v232
    %v235 = vrot.slane %v233, 1
    %v237 = vadd.f32 %v231, %v235
    %v238 = vstv %s30
    %v239 = vmul.f32 %v206, %v238
    %v241 = vrot.slane %v239, 2
    %v243 = vadd.f32 %v237, %v241
    %v244 = vstv %s31
    %v245 = vmul.f32 %v206, %v244
    %v247 = vrot.slane %v245, 3
    %v249 = vadd.f32 %v243, %v247
    %v250 = vstv %s65
    %v251 = vadd.f32 %v249, %v250
    %v252 = vmax.f32 %v251, 0.0
    %v253 = vstv %s32
    %v254 = vmul.f32 %v206, %v253
    %v255 = vstv %s33
    %v256 = vmul.f32 %v206, %v255
    %v258 = vrot.slane %v256, 1
    %v260 = vadd.f32 %v254, %v258
    %v261 = vstv %s34
    %v262 = vmul.f32 %v206, %v261
    %v264 = vrot.slane %v262, 2
    %v266 = vadd.f32 %v260, %v264
    %v267 = vstv %s35
    %v268 = vmul.f32 %v206, %v267
    %v270 = vrot.slane %v268, 3
    %v272 = vadd.f32 %v266, %v270
    %v273 = vstv %s66
    %v274 = vadd.f32 %v272, %v273
    %v275 = vmax.f32 %v274, 0.0
    %v276 = vstv %s36
    %v277 = vmul.f32 %v206, %v276
    %v278 = vstv %s37
    %v279 = vmul.f32 %v206, %v278
    %v281 = vrot.slane %v279, 1
    %v283 = vadd.f32 %v277, %v281
    %v284 = vstv %s38
    %v285 = vmul.f32 %v206, %v284
    %v287 = vrot.slane %v285, 2
    %v289 = vadd.f32 %v283, %v287
    %v290 = vstv %s39
    %v291 = vmul.f32 %v206, %v290
    %v293 = vrot.slane %v291, 3
    %v295 = vadd.f32 %v289, %v293
    %v296 = vstv %s67
    %v297 = vadd.f32 %v295, %v296
    %v298 = vmax.f32 %v297, 0.0
    %v299 = vstv %s40
    %v300 = vmul.f32 %v206, %v299
    %v301 = vstv %s41
    %v302 = vmul.f32 %v206, %v301
    %v304 = vrot.slane %v302, 1
    %v306 = vadd.f32 %v300, %v304
    %v307 = vstv %s42
    %v308 = vmul.f32 %v206, %v307
    %v310 = vrot.slane %v308, 2
    %v312 = vadd.f32 %v306, %v310
    %v313 = vstv %s43
    %v314 = vmul.f32 %v206, %v313
    %v316 = vrot.slane %v314, 3
    %v318 = vadd.f32 %v312, %v316
    %v319 = vstv %s68
    %v320 = vadd.f32 %v318, %v319
    %v321 = vmax.f32 %v320, 0.0
    %v322 = vstv %s44
    %v323 = vmul.f32 %v206, %v322
    %v324 = vstv %s45
    %v325 = vmul.f32 %v206, %v324
    %v327 = vrot.slane %v325, 1
    %v329 = vadd.f32 %v323, %v327
    %v330 = vstv %s46
    %v331 = vmul.f32 %v206, %v330
    %v333 = vrot.slane %v331, 2
    %v335 = vadd.f32 %v329, %v333
    %v336 = vstv %s47
    %v337 = vmul.f32 %v206, %v336
    %v339 = vrot.slane %v337, 3
    %v341 = vadd.f32 %v335, %v339
    %v342 = vstv %s69
    %v343 = vadd.f32 %v341, %v342
    %v344 = vmax.f32 %v343, 0.0
    %v345 = vstv %s48
    %v346 = vmul.f32 %v206, %v345
    %v347 = vstv %s49
    %v348 = vmul.f32 %v206, %v347
    %v350 = vrot.slane %v348, 1
    %v352 = vadd.f32 %v346, %v350
    %v353 = vstv %s50
    %v354 = vmul.f32 %v206, %v353
    %v356 = vrot.slane %v354, 2
    %v358 = vadd.f32 %v352, %v356
    %v359 = vstv %s51
    %v360 = vmul.f32 %v206, %v359
    %v362 = vrot.slane %v360, 3
    %v364 = vadd.f32 %v358, %v362
    %v365 = vstv %s70
    %v366 = vadd.f32 %v364, %v365
    %v367 = vmax.f32 %v366, 0.0
    %v368 = vstv %s52
    %v369 = vmul.f32 %v206, %v368
    %v370 = vstv %s53
    %v371 = vmul.f32 %v206, %v370
    %v373 = vrot.slane %v371, 1
    %v375 = vadd.f32 %v369, %v373
    %v376 = vstv %s54
    %v377 = vmul.f32 %v206, %v376
    %v379 = vrot.slane %v377, 2
    %v381 = vadd.f32 %v375, %v379
    %v382 = vstv %s55
    %v383 = vmul.f32 %v206, %v382
    %v385 = vrot.slane %v383, 3
    %v387 = vadd.f32 %v381, %v385
    %v388 = vstv %s71
    %v389 = vadd.f32 %v387, %v388
    %v390 = vmax.f32 %v389, 0.0
    %v391 = vstv %s56
    %v392 = vmul.f32 %v206, %v391
    %v393 = vstv %s57
    %v394 = vmul.f32 %v206, %v393
    %v396 = vrot.slane %v394, 1
    %v398 = vadd.f32 %v392, %v396
    %v399 = vstv %s58
    %v400 = vmul.f32 %v206, %v399
    %v402 = vrot.slane %v400, 2
    %v404 = vadd.f32 %v398, %v402
    %v405 = vstv %s59
    %v406 = vmul.f32 %v206, %v405
    %v408 = vrot.slane %v406, 3
    %v410 = vadd.f32 %v404, %v408
    %v411 = vstv %s72
    %v412 = vadd.f32 %v410, %v411
    %v413 = vmax.f32 %v412, 0.0
    %v414 = vstv %s60
    %v415 = vmul.f32 %v206, %v414
    %v416 = vstv %s61
    %v417 = vmul.f32 %v206, %v416
    %v419 = vrot.slane %v417, 1
    %v421 = vadd.f32 %v415, %v419
    %v422 = vstv %s62
    %v423 = vmul.f32 %v206, %v422
    %v425 = vrot.slane %v423, 2
    %v427 = vadd.f32 %v421, %v425
    %v428 = vstv %s63
    %v429 = vmul.f32 %v206, %v428
    %v431 = vrot.slane %v429, 3
    %v433 = vadd.f32 %v427, %v431
    %v434 = vstv %s73
    %v435 = vadd.f32 %v433, %v434
    %v436 = vmax.f32 %v435, 0.0
    %v437 = vstv %s74
    %v438 = vmul.f32 %v229, %v437
    %v439 = vstv %s75
    %v440 = vmul.f32 %v252, %v439
    %v441 = vadd.f32 %v438, %v440
    %v442 = vstv %s76
    %v443 = vmul.f32 %v275, %v442
    %v444 = vadd.f32 %v441, %v443
    %v445 = vstv %s77
    %v446 = vmul.f32 %v298, %v445
    %v447 = vadd.f32 %v444, %v446
    %v448 = vstv %s78
    %v449 = vmul.f32 %v321, %v448
    %v450 = vadd.f32 %v447, %v449
    %v451 = vstv %s79
    %v452 = vmul.f32 %v344, %v451
    %v453 = vadd.f32 %v450, %v452
    %v454 = vstv %s80
    %v455 = vmul.f32 %v367, %v454
    %v456 = vadd.f32 %v453, %v455
    %v457 = vstv %s81
    %v458 = vmul.f32 %v390, %v457
    %v459 = vadd.f32 %v456, %v458
    %v460 = vstv %s82
    %v461 = vmul.f32 %v413, %v460
    %v462 = vadd.f32 %v459, %v461
    %v463 = vstv %s83
    %v464 = vmul.f32 %v436, %v463
    %v465 = vadd.f32 %v462, %v464
    %v466 = vstv %s174
    %v467 = vadd.f32 %v465, %v466
    %v468 = vmax.f32 %v467, 0.0
    %v469 = vstv %s84
    %v470 = vmul.f32 %v229, %v469
    %v471 = vstv %s85
    %v472 = vmul.f32 %v252, %v471
    %v473 = vadd.f32 %v470, %v472
    %v474 = vstv %s86
    %v475 = vmul.f32 %v275, %v474
    %v476 = vadd.f32 %v473, %v475
    %v477 = vstv %s87
    %v478 = vmul.f32 %v298, %v477
    %v479 = vadd.f32 %v476, %v478
    %v480 = vstv %s88
    %v481 = vmul.f32 %v321, %v480
    %v482 = vadd.f32 %v479, %v481
    %v483 = vstv %s89
    %v484 = vmul.f32 %v344, %v483
    %v485 = vadd.f32 %v482, %v484
    %v486 = vstv %s90
    %v487 = vmul.f32 %v367, %v486
    %v488 = vadd.f32 %v485, %v487
    %v489 = vstv %s91
    %v490 = vmul.f32 %v390, %v489
    %v491 = vadd.f32 %v488, %v490
    %v492 = vstv %s92
    %v493 = vmul.f32 %v413, %v492
    %v494 = vadd.f32 %v491, %v493
    %v495 = vstv %s93
    %v496 = vmul.f32 %v436, %v495
    %v497 = vadd.f32 %v494, %v496
    %v498 = vstv %s175
    %v499 = vadd.f32 %v497, %v498
    %v500 = vmax.f32 %v499, 0.0
    %v501 = vstv %s94
    %v502 = vmul.f32 %v229, %v501
    %v503 = vstv %s95
    %v504 = vmul.f32 %v252, %v503
    %v505 = vadd.f32 %v502, %v504
    %v506 = vstv %s96
    %v507 = vmul.f32 %v275, %v506
    %v508 = vadd.f32 %v505, %v507
    %v509 = vstv %s97
    %v510 = vmul.f32 %v298, %v509
    %v511 = vadd.f32 %v508, %v510
    %v512 = vstv %s98
    %v513 = vmul.f32 %v321, %v512
    %v514 = vadd.f32 %v511, %v513
    %v515 = vstv %s99
    %v516 = vmul.f32 %v344, %v515
    %v517 = vadd.f32 %v514, %v516
    %v518 = vstv %s100
    %v519 = vmul.f32 %v367, %v518
    %v520 = vadd.f32 %v517, %v519
    %v521 = vstv %s101
    %v522 = vmul.f32 %v390, %v521
    %v523 = vadd.f32 %v520, %v522
    %v524 = vstv %s102
    %v525 = vmul.f32 %v413, %v524
    %v526 = vadd.f32 %v523, %v525
    %v527 = vstv %s103
    %v528 = vmul.f32 %v436, %v527
    %v529 = vadd.f32 %v526, %v528
    %v530 = vstv %s176
    %v531 = vadd.f32 %v529, %v530
    %v532 = vmax.f32 %v531, 0.0
    %v533 = vstv %s104
    %v534 = vmul.f32 %v229, %v533
    %v535 = vstv %s105
    %v536 = vmul.f32 %v252, %v535
    %v537 = vadd.f32 %v534, %v536
    %v538 = vstv %s106
    %v539 = vmul.f32 %v275, %v538
    %v540 = vadd.f32 %v537, %v539
    %v541 = vstv %s107
    %v542 = vmul.f32 %v298, %v541
    %v543 = vadd.f32 %v540, %v542
    %v544 = vstv %s108
    %v545 = vmul.f32 %v321, %v544
    %v546 = vadd.f32 %v543, %v545
    %v547 = vstv %s109
    %v548 = vmul.f32 %v344, %v547
    %v549 = vadd.f32 %v546, %v548
    %v550 = vstv %s110
    %v551 = vmul.f32 %v367, %v550
    %v552 = vadd.f32 %v549, %v551
    %v553 = vstv %s111
    %v554 = vmul.f32 %v390, %v553
    %v555 = vadd.f32 %v552, %v554
    %v556 = vstv %s112
    %v557 = vmul.f32 %v413, %v556
    %v558 = vadd.f32 %v555, %v557
    %v559 = vstv %s113
    %v560 = vmul.f32 %v436, %v559
    %v561 = vadd.f32 %v558, %v560
    %v562 = vstv %s177
    %v563 = vadd.f32 %v561, %v562
    %v564 = vmax.f32 %v563, 0.0
    %v565 = vstv %s114
    %v566 = vmul.f32 %v229, %v565
    %v567 = vstv %s115
    %v568 = vmul.f32 %v252, %v567
    %v569 = vadd.f32 %v566, %v568
    %v570 = vstv %s116
    %v571 = vmul.f32 %v275, %v570
    %v572 = vadd.f32 %v569, %v571
    %v573 = vstv %s117
    %v574 = vmul.f32 %v298, %v573
    %v575 = vadd.f32 %v572, %v574
    %v576 = vstv %s118
    %v577 = vmul.f32 %v321, %v576
    %v578 = vadd.f32 %v575, %v577
    %v579 = vstv %s119
    %v580 = vmul.f32 %v344, %v579
    %v581 = vadd.f32 %v578, %v580
    %v582 = vstv %s120
    %v583 = vmul.f32 %v367, %v582
    %v584 = vadd.f32 %v581, %v583
    %v585 = vstv %s121
    %v586 = vmul.f32 %v390, %v585
    %v587 = vadd.f32 %v584, %v586
    %v588 = vstv %s122
    %v589 = vmul.f32 %v413, %v588
    %v590 = vadd.f32 %v587, %v589
    %v591 = vstv %s123
    %v592 = vmul.f32 %v436, %v591
    %v593 = vadd.f32 %v590, %v592
    %v594 = vstv %s178
    %v595 = vadd.f32 %v593, %v594
    %v596 = vmax.f32 %v595, 0.0
    %v597 = vstv %s124
    %v598 = vmul.f32 %v229, %v597
    %v599 = vstv %s125
    %v600 = vmul.f32 %v252, %v599
    %v601 = vadd.f32 %v598, %v600
    %v602 = vstv %s126
    %v603 = vmul.f32 %v275, %v602
    %v604 = vadd.f32 %v601, %v603
    %v605 = vstv %s127
    %v606 = vmul.f32 %v298, %v605
    %v607 = vadd.f32 %v604, %v606
    %v608 = vstv %s128
    %v609 = vmul.f32 %v321, %v608
    %v610 = vadd.f32 %v607, %v609
    %v611 = vstv %s129
    %v612 = vmul.f32 %v344, %v611
    %v613 = vadd.f32 %v610, %v612
    %v614 = vstv %s130
    %v615 = vmul.f32 %v367, %v614
    %v616 = vadd.f32 %v613, %v615
    %v617 = vstv %s131
    %v618 = vmul.f32 %v390, %v617
    %v619 = vadd.f32 %v616, %v618
    %v620 = vstv %s132
    %v621 = vmul.f32 %v413, %v620
    %v622 = vadd.f32 %v619, %v621
    %v623 = vstv %s133
    %v624 = vmul.f32 %v436, %v623
    %v625 = vadd.f32 %v622, %v624
    %v626 = vstv %s179
    %v627 = vadd.f32 %v625, %v626
    %v628 = vmax.f32 %v627, 0.0
    %v629 = vstv %s134
    %v630 = vmul.f32 %v229, %v629
    %v631 = vstv %s135
    %v632 = vmul.f32 %v252, %v631
    %v633 = vadd.f32 %v630, %v632
    %v634 = vstv %s136
    %v635 = vmul.f32 %v275, %v634
    %v636 = vadd.f32 %v633, %v635
    %v637 = vstv %s137
    %v638 = vmul.f32 %v298, %v637
    %v639 = vadd.f32 %v636, %v638
    %v640 = vstv %s138
    %v641 = vmul.f32 %v321, %v640
    %v642 = vadd.f32 %v639, %v641
    %v643 = vstv %s139
    %v644 = vmul.f32 %v344, %v643
    %v645 = vadd.f32 %v642, %v644
    %v646 = vstv %s140
    %v647 = vmul.f32 %v367, %v646
    %v648 = vadd.f32 %v645, %v647
    %v649 = vstv %s141
    %v650 = vmul.f32 %v390, %v649
    %v651 = vadd.f32 %v648, %v650
    %v652 = vstv %s142
    %v653 = vmul.f32 %v413, %v652
    %v654 = vadd.f32 %v651, %v653
    %v655 = vstv %s143
    %v656 = vmul.f32 %v436, %v655
    %v657 = vadd.f32 %v654, %v656
    %v658 = vstv %s180
    %v659 = vadd.f32 %v657, %v658
    %v660 = vmax.f32 %v659, 0.0
    %v661 = vstv %s144
    %v662 = vmul.f32 %v229, %v661
    %v663 = vstv %s145
    %v664 = vmul.f32 %v252, %v663
    %v665 = vadd.f32 %v662, %v664
    %v666 = vstv %s146
    %v667 = vmul.f32 %v275, %v666
    %v668 = vadd.f32 %v665, %v667
    %v669 = vstv %s147
    %v670 = vmul.f32 %v298, %v669
    %v671 = vadd.f32 %v668, %v670
    %v672 = vstv %s148
    %v673 = vmul.f32 %v321, %v672
    %v674 = vadd.f32 %v671, %v673
    %v675 = vstv %s149
    %v676 = vmul.f32 %v344, %v675
    %v677 = vadd.f32 %v674, %v676
    %v678 = vstv %s150
    %v679 = vmul.f32 %v367, %v678
    %v680 = vadd.f32 %v677, %v679
    %v681 = vstv %s151
    %v682 = vmul.f32 %v390, %v681
    %v683 = vadd.f32 %v680, %v682
    %v684 = vstv %s152
    %v685 = vmul.f32 %v413, %v684
    %v686 = vadd.f32 %v683, %v685
    %v687 = vstv %s153
    %v688 = vmul.f32 %v436, %v687
    %v689 = vadd.f32 %v686, %v688
    %v690 = vstv %s181
    %v691 = vadd.f32 %v689, %v690
    %v692 = vmax.f32 %v691, 0.0
    %v693 = vstv %s154
    %v694 = vmul.f32 %v229, %v693
    %v695 = vstv %s155
    %v696 = vmul.f32 %v252, %v695
    %v697 = vadd.f32 %v694, %v696
    %v698 = vstv %s156
    %v699 = vmul.f32 %v275, %v698
    %v700 = vadd.f32 %v697, %v699
    %v701 = vstv %s157
    %v702 = vmul.f32 %v298, %v701
    %v703 = vadd.f32 %v700, %v702
    %v704 = vstv %s158
    %v705 = vmul.f32 %v321, %v704
    %v706 = vadd.f32 %v703, %v705
    %v707 = vstv %s159
    %v708 = vmul.f32 %v344, %v707
    %v709 = vadd.f32 %v706, %v708
    %v710 = vstv %s160
    %v711 = vmul.f32 %v367, %v710
    %v712 = vadd.f32 %v709, %v711
    %v713 = vstv %s161
    %v714 = vmul.f32 %v390, %v713
    %v715 = vadd.f32 %v712, %v714
    %v716 = vstv %s162
    %v717 = vmul.f32 %v413, %v716
    %v718 = vadd.f32 %v715, %v717
    %v719 = vstv %s163
    %v720 = vmul.f32 %v436, %v719
    %v721 = vadd.f32 %v718, %v720
    %v722 = vstv %s182
    %v723 = vadd.f32 %v721, %v722
    %v724 = vmax.f32 %v723, 0.0
    %v725 = vstv %s164
    %v726 = vmul.f32 %v229, %v725
    %v727 = vstv %s165
    %v728 = vmul.f32 %v252, %v727
    %v729 = vadd.f32 %v726, %v728
    %v730 = vstv %s166
    %v731 = vmul.f32 %v275, %v730
    %v732 = vadd.f32 %v729, %v731
    %v733 = vstv %s167
    %v734 = vmul.f32 %v298, %v733
    %v735 = vadd.f32 %v732, %v734
    %v736 = vstv %s168
    %v737 = vmul.f32 %v321, %v736
    %v738 = vadd.f32 %v735, %v737
    %v739 = vstv %s169
    %v740 = vmul.f32 %v344, %v739
    %v741 = vadd.f32 %v738, %v740
    %v742 = vstv %s170
    %v743 = vmul.f32 %v367, %v742
    %v744 = vadd.f32 %v741, %v743
    %v745 = vstv %s171
    %v746 = vmul.f32 %v390, %v745
    %v747 = vadd.f32 %v744, %v746
    %v748 = vstv %s172
    %v749 = vmul.f32 %v413, %v748
    %v750 = vadd.f32 %v747, %v749
    %v751 = vstv %s173
    %v752 = vmul.f32 %v436, %v751
    %v753 = vadd.f32 %v750, %v752
    %v754 = vstv %s183
    %v755 = vadd.f32 %v753, %v754
    %v756 = vmax.f32 %v755, 0.0
    %v757 = vstv %s184
    %v758 = vmul.f32 %v468, %v757
    %v759 = vstv %s185
    %v760 = vmul.f32 %v500, %v759
    %v761 = vadd.f32 %v758, %v760
    %v762 = vstv %s186
    %v763 = vmul.f32 %v532, %v762
    %v764 = vadd.f32 %v761, %v763
    %v765 = vstv %s187
    %v766 = vmul.f32 %v564, %v765
    %v767 = vadd.f32 %v764, %v766
    %v768 = vstv %s188
    %v769 = vmul.f32 %v596, %v768
    %v770 = vadd.f32 %v767, %v769
    %v771 = vstv %s189
    %v772 = vmul.f32 %v628, %v771
    %v773 = vadd.f32 %v770, %v772
    %v774 = vstv %s190
    %v775 = vmul.f32 %v660, %v774
    %v776 = vadd.f32 %v773, %v775
    %v777 = vstv %s191
    %v778 = vmul.f32 %v692, %v777
    %v779 = vadd.f32 %v776, %v778
    %v780 = vstv %s192
    %v781 = vmul.f32 %v724, %v780
    %v782 = vadd.f32 %v779, %v781
    %v783 = vstv %s193
    %v784 = vmul.f32 %v756, %v783
    %v785 = vadd.f32 %v782, %v784
    %v786 = vstv %s204
    %v787 = vadd.f32 %v785, %v786
    %v788 = vstv %s194
    %v789 = vmul.f32 %v468, %v788
    %v790 = vstv %s195
    %v791 = vmul.f32 %v500, %v790
    %v792 = vadd.f32 %v789, %v791
    %v793 = vstv %s196
    %v794 = vmul.f32 %v532, %v793
    %v795 = vadd.f32 %v792, %v794
    %v796 = vstv %s197
    %v797 = vmul.f32 %v564, %v796
    %v798 = vadd.f32 %v795, %v797
    %v799 = vstv %s198
    %v800 = vmul.f32 %v596, %v799
    %v801 = vadd.f32 %v798, %v800
    %v802 = vstv %s199
    %v803 = vmul.f32 %v628, %v802
    %v804 = vadd.f32 %v801, %v803
    %v805 = vstv %s200
    %v806 = vmul.f32 %v660, %v805
    %v807 = vadd.f32 %v804, %v806
    %v808 = vstv %s201
    %v809 = vmul.f32 %v692, %v808
    %v810 = vadd.f32 %v807, %v809
    %v811 = vstv %s202
    %v812 = vmul.f32 %v724, %v811
    %v813 = vadd.f32 %v810, %v812
    %v814 = vstv %s203
    %v815 = vmul.f32 %v756, %v814
    %v816 = vadd.f32 %v813, %v815
    %v817 = vstv %s205
    %v818 = vadd.f32 %v816, %v817
    %v820 = vrot.slane %v818, 7
    %vm822 = vcmask 1040384
    %v823 = vsel %vm822, %v787, %v820
    %824 = vst [vmem:[%s2] sm:$0x3] %v823
    // Predicated region
    $region14: #{neural_network_forward.1} parent=1 // pred_check
      _
    $region15: #{neural_network_forward.1} parent=1 // pred_check_branch
      %826 = sbr.rel (0) target = $region17
    $region16: #{neural_network_forward.1} parent=1 // pred_region
      _
    $region17: #{neural_network_forward.1} parent=1 // pred_fallthru
      _
    // Predicated region
    $region18: #{neural_network_forward.1} parent=1 // pred_check
      _
    $region19: #{neural_network_forward.1} parent=1 // pred_check_branch
      %828 = sbr.rel (0) target = $region21
    $region20: #{neural_network_forward.1} parent=1 // pred_region
      _
    $region21: #{neural_network_forward.1} parent=1 // pred_fallthru
      _
    %829 = vsyncpa [#allocation3], 1

</llo_original>
